<compile_context>
chip_gen: v6e
topology: v6e:2x2x1
jax: 0.10.0
libtpu: 0.0.40
codegen_flags: <defaults>
</compile_context>

<pallas_src>
import functools

import jax
import jax.numpy as jnp
from jax import lax
from jax.experimental import pallas as pl
from jax.experimental.pallas import tpu as pltpu


def _make_resblock_kernel(H, NWC, K, res_scale):
    def kernel(x_ref, s_ref, m1_ref, b1_ref, m2_ref, b2_ref, o_ref):
        # Single lane-dense load; reused for the residual add.
        x = x_ref[...].astype(jnp.float32)                 # (H, NWC)

        def conv(src, m_ref, b_ref):
            # sum_kh (S[kh] @ src) @ M[kh]  + bias  — all zero-padding is
            # encoded in the banded S / M matrices built by the wrapper.
            acc = jnp.broadcast_to(b_ref[...].astype(jnp.float32), (H, NWC))
            for kh in range(K):                            # K=3: tiny static unroll
                shifted = jnp.dot(s_ref[kh], src,
                                  preferred_element_type=jnp.float32)
                acc = acc + jnp.dot(shifted, m_ref[kh],
                                    preferred_element_type=jnp.float32)
            return acc

        y = jnp.maximum(conv(x, m1_ref, b1_ref), 0.0)      # conv1 + bias + ReLU
        res = conv(y, m2_ref, b2_ref)                      # conv2 + bias
        o_ref[...] = (x + res_scale * res).astype(o_ref.dtype)

    return kernel


def _band_matrices(w_hwio, N, W, C):
    """HWIO conv weights -> per-kh banded (NWC_in, NWC_out) lane matrices.

    M[kh][j_in, j_out] = W[kh, w_in - w_out + pad, c_in, c_out]
    when both lanes belong to the same image and the horizontal tap is in
    range; zero otherwise (this zero band IS the SAME padding in w).
    """
    K = w_hwio.shape[0]
    pad = K // 2
    WC = W * C
    NWC = N * WC
    j = jnp.arange(NWC)
    n_j, r_j = j // WC, j % WC
    w_j, c_j = r_j // C, r_j % C
    n_i, w_i, c_i = n_j[:, None], w_j[:, None], c_j[:, None]   # input lane (rows)
    n_o, w_o, c_o = n_j[None, :], w_j[None, :], c_j[None, :]   # output lane (cols)
    kw = w_i - w_o + pad
    valid = (n_i == n_o) & (kw >= 0) & (kw < K)
    kw_c = jnp.clip(kw, 0, K - 1)
    mats = []
    for kh in range(K):
        vals = w_hwio[kh][kw_c, c_i, c_o]                       # (NWC, NWC)
        mats.append(jnp.where(valid, vals, 0.0))
    return jnp.stack(mats, axis=0).astype(jnp.float32)          # (K, NWC, NWC)


def _shift_matrices(H, K):
    """(K, H, H) banded 0/1 row-shift matrices: (S[kh] @ X)[h] = X[h+kh-pad],
    with out-of-range rows giving zero (SAME padding in h)."""
    pad = K // 2
    h = jnp.arange(H)
    mats = [(h[None, :] == h[:, None] + (kh - pad)).astype(jnp.float32)
            for kh in range(K)]
    return jnp.stack(mats, axis=0)


@functools.partial(jax.jit, static_argnames=("res_scale",))
def resblock_forward(x_nchw, w1_hwio, b1, w2_hwio, b2, *, res_scale=1.0):
    """ResBlock forward.  x_nchw: (N, C, H, W); weights in HWIO layout."""
    N, C, H, W = x_nchw.shape
    K = w1_hwio.shape[0]
    assert K % 2 == 1, "even kernel sizes need asymmetric SAME padding"
    WC = W * C
    NWC = N * WC

    # Lane-dense layout: rows = h, lanes = (n, w, c).  NWC = 128 here, so HBM
    # I/O is full-lane-width; the transpose is the only wrapper data movement.
    x2d = jnp.transpose(x_nchw, (2, 0, 3, 1)).reshape(H, NWC)

    m1 = _band_matrices(w1_hwio, N, W, C)
    m2 = _band_matrices(w2_hwio, N, W, C)
    s = _shift_matrices(H, K)
    b1v = jnp.tile(b1.astype(jnp.float32), N * W).reshape(1, NWC)
    b2v = jnp.tile(b2.astype(jnp.float32), N * W).reshape(1, NWC)

    kernel = _make_resblock_kernel(H, NWC, K, float(res_scale))

    out2d = pl.pallas_call(
        kernel,
        out_shape=jax.ShapeDtypeStruct((H, NWC), x_nchw.dtype),
        grid_spec=pltpu.PrefetchScalarGridSpec(
            num_scalar_prefetch=0,
            grid=(1,),
            in_specs=[
                pl.BlockSpec((H, NWC), lambda i: (0, 0)),          # x slab
                pl.BlockSpec((K, H, H), lambda i: (0, 0, 0)),      # S
                pl.BlockSpec((K, NWC, NWC), lambda i: (0, 0, 0)),  # M1
                pl.BlockSpec((1, NWC), lambda i: (0, 0)),          # b1
                pl.BlockSpec((K, NWC, NWC), lambda i: (0, 0, 0)),  # M2
                pl.BlockSpec((1, NWC), lambda i: (0, 0)),          # b2
            ],
            out_specs=pl.BlockSpec((H, NWC), lambda i: (0, 0)),
        ),
        compiler_params=pltpu.CompilerParams(
            # No scratch / no step-0 init dependence -> parallel is safe
            # (v7x megacore).  Explicit VMEM limit per review (v5e 16 MiB
            # scoped default; total usage here is < 1 MiB).
            dimension_semantics=("parallel",),
            vmem_limit_bytes=16 * 1024 * 1024,
        ),
    )(x2d, s, m1, b1v, m2, b2v)

    # (H, NWC) -> (H, N, W, C) -> (N, C, H, W)
    return jnp.transpose(out2d.reshape(H, N, W, C), (1, 3, 0, 2))


def _reference(x_nchw, w1_hwio, b1, w2_hwio, b2, res_scale):
    """Pure-JAX reference matching PyTorch ResBlock semantics (NCHW)."""
    def conv(x, w_hwio, b):
        w_oihw = jnp.transpose(w_hwio, (3, 2, 0, 1))   # HWIO -> OIHW
        y = lax.conv_general_dilated(
            x, w_oihw, window_strides=(1, 1), padding="SAME",
            dimension_numbers=("NCHW", "OIHW", "NCHW"))
        return y + b.reshape(1, -1, 1, 1)

    res = conv(jnp.maximum(conv(x_nchw, w1_hwio, b1), 0.0), w2_hwio, b2)
    return x_nchw + res_scale * res


if __name__ == "__main__":
    # Module config: conv=default_conv, n_feat=4, kernel_size=3, bias=True,
    # bn=False, act=ReLU, res_scale=1.
    N, C, H, W, K = 2, 4, 16, 16, 3
    res_scale = 1.0

    key = jax.random.PRNGKey(0)
    kx, k1, kb1, k2, kb2 = jax.random.split(key, 5)

    x = jax.random.normal(kx, (N, C, H, W), jnp.float32)
    # Synthetic parameters (HWIO layout: kh, kw, Cin, Cout).
    w1 = jax.random.normal(k1, (K, K, C, C), jnp.float32) * 0.1
    b1 = jax.random.normal(kb1, (C,), jnp.float32) * 0.1
    w2 = jax.random.normal(k2, (K, K, C, C), jnp.float32) * 0.1
    b2 = jax.random.normal(kb2, (C,), jnp.float32) * 0.1

    out = resblock_forward(x, w1, b1, w2, b2, res_scale=res_scale)
    out = jax.block_until_ready(out)

    ref = _reference(x, w1, b1, w2, b2, res_scale)
    assert out.shape == (N, C, H, W)
    assert jnp.allclose(out, ref, atol=1e-4, rtol=1e-4), (
        float(jnp.max(jnp.abs(out - ref))))

    print("KERNEL_OK")
</pallas_src>

<mosaic_0001>
module attributes {stable_mosaic.version = 11 : i64} {
  func.func @kernel(%arg0: i32, %arg1: memref<16x128xf32, #tpu.memory_space<vmem>>, %arg2: memref<3x16x16xf32, #tpu.memory_space<vmem>>, %arg3: memref<3x128x128xf32, #tpu.memory_space<vmem>>, %arg4: memref<1x128xf32, #tpu.memory_space<vmem>>, %arg5: memref<3x128x128xf32, #tpu.memory_space<vmem>>, %arg6: memref<1x128xf32, #tpu.memory_space<vmem>>, %arg7: memref<16x128xf32, #tpu.memory_space<vmem>>) attributes {dimension_semantics = [#tpu.dimension_semantics<parallel>], iteration_bounds = array<i64: 1>, scalar_prefetch = 0 : i64, scratch_operands = 0 : i64, tpu.core_type = #tpu.core_type<tc>, window_params = [{pipeline_mode = #tpu.pipeline_mode<synchronous>, transform_indices = @transform_0, window_bounds = array<i64: 16, 128>}, {pipeline_mode = #tpu.pipeline_mode<synchronous>, transform_indices = @transform_1, window_bounds = array<i64: 3, 16, 16>}, {pipeline_mode = #tpu.pipeline_mode<synchronous>, transform_indices = @transform_2, window_bounds = array<i64: 3, 128, 128>}, {pipeline_mode = #tpu.pipeline_mode<synchronous>, transform_indices = @transform_3, window_bounds = array<i64: 1, 128>}, {pipeline_mode = #tpu.pipeline_mode<synchronous>, transform_indices = @transform_4, window_bounds = array<i64: 3, 128, 128>}, {pipeline_mode = #tpu.pipeline_mode<synchronous>, transform_indices = @transform_5, window_bounds = array<i64: 1, 128>}, {pipeline_mode = #tpu.pipeline_mode<synchronous>, transform_indices = @transform_6, window_bounds = array<i64: 16, 128>}]} {
    %c0 = arith.constant 0 : index
    %c0_0 = arith.constant 0 : index
    %0 = vector.load %arg1[%c0, %c0_0] : memref<16x128xf32, #tpu.memory_space<vmem>>, vector<16x128xf32>
    %c0_1 = arith.constant 0 : index
    %c0_2 = arith.constant 0 : index
    %1 = vector.load %arg4[%c0_1, %c0_2] : memref<1x128xf32, #tpu.memory_space<vmem>>, vector<1x128xf32>
    %2 = vector.shape_cast %1 : vector<1x128xf32> to vector<1x128xf32>
    %3 = vector.broadcast %2 : vector<1x128xf32> to vector<16x128xf32>
    %c0_3 = arith.constant 0 : index
    %c0_4 = arith.constant 0 : index
    %c0_5 = arith.constant 0 : index
    %4 = vector.load %arg2[%c0_3, %c0_4, %c0_5] : memref<3x16x16xf32, #tpu.memory_space<vmem>>, vector<1x16x16xf32>
    %5 = vector.shape_cast %4 : vector<1x16x16xf32> to vector<16x16xf32>
    %cst = arith.constant dense<0.000000e+00> : vector<16x128xf32>
    %6 = tpu.matmul %5, %0, %cst {dimension_numbers = #tpu.dot_dimension_numbers<[1], [0], [0], [1], [0, 0, 1, 1], [], []>} : vector<16x16xf32>, vector<16x128xf32>, vector<16x128xf32> -> vector<16x128xf32>
    %c0_6 = arith.constant 0 : index
    %c0_7 = arith.constant 0 : index
    %c0_8 = arith.constant 0 : index
    %7 = vector.load %arg3[%c0_6, %c0_7, %c0_8] : memref<3x128x128xf32, #tpu.memory_space<vmem>>, vector<1x128x128xf32>
    %8 = vector.shape_cast %7 : vector<1x128x128xf32> to vector<128x128xf32>
    %cst_9 = arith.constant dense<0.000000e+00> : vector<16x128xf32>
    %9 = tpu.matmul %6, %8, %cst_9 {dimension_numbers = #tpu.dot_dimension_numbers<[1], [0], [0], [1], [0, 0, 1, 1], [], []>} : vector<16x128xf32>, vector<128x128xf32>, vector<16x128xf32> -> vector<16x128xf32>
    %10 = arith.addf %3, %9 : vector<16x128xf32>
    %c1 = arith.constant 1 : index
    %c0_10 = arith.constant 0 : index
    %c0_11 = arith.constant 0 : index
    %11 = vector.load %arg2[%c1, %c0_10, %c0_11] : memref<3x16x16xf32, #tpu.memory_space<vmem>>, vector<1x16x16xf32>
    %12 = vector.shape_cast %11 : vector<1x16x16xf32> to vector<16x16xf32>
    %cst_12 = arith.constant dense<0.000000e+00> : vector<16x128xf32>
    %13 = tpu.matmul %12, %0, %cst_12 {dimension_numbers = #tpu.dot_dimension_numbers<[1], [0], [0], [1], [0, 0, 1, 1], [], []>} : vector<16x16xf32>, vector<16x128xf32>, vector<16x128xf32> -> vector<16x128xf32>
    %c1_13 = arith.constant 1 : index
    %c0_14 = arith.constant 0 : index
    %c0_15 = arith.constant 0 : index
    %14 = vector.load %arg3[%c1_13, %c0_14, %c0_15] : memref<3x128x128xf32, #tpu.memory_space<vmem>>, vector<1x128x128xf32>
    %15 = vector.shape_cast %14 : vector<1x128x128xf32> to vector<128x128xf32>
    %cst_16 = arith.constant dense<0.000000e+00> : vector<16x128xf32>
    %16 = tpu.matmul %13, %15, %cst_16 {dimension_numbers = #tpu.dot_dimension_numbers<[1], [0], [0], [1], [0, 0, 1, 1], [], []>} : vector<16x128xf32>, vector<128x128xf32>, vector<16x128xf32> -> vector<16x128xf32>
    %17 = arith.addf %10, %16 : vector<16x128xf32>
    %c2 = arith.constant 2 : index
    %c0_17 = arith.constant 0 : index
    %c0_18 = arith.constant 0 : index
    %18 = vector.load %arg2[%c2, %c0_17, %c0_18] : memref<3x16x16xf32, #tpu.memory_space<vmem>>, vector<1x16x16xf32>
    %19 = vector.shape_cast %18 : vector<1x16x16xf32> to vector<16x16xf32>
    %cst_19 = arith.constant dense<0.000000e+00> : vector<16x128xf32>
    %20 = tpu.matmul %19, %0, %cst_19 {dimension_numbers = #tpu.dot_dimension_numbers<[1], [0], [0], [1], [0, 0, 1, 1], [], []>} : vector<16x16xf32>, vector<16x128xf32>, vector<16x128xf32> -> vector<16x128xf32>
    %c2_20 = arith.constant 2 : index
    %c0_21 = arith.constant 0 : index
    %c0_22 = arith.constant 0 : index
    %21 = vector.load %arg3[%c2_20, %c0_21, %c0_22] : memref<3x128x128xf32, #tpu.memory_space<vmem>>, vector<1x128x128xf32>
    %22 = vector.shape_cast %21 : vector<1x128x128xf32> to vector<128x128xf32>
    %cst_23 = arith.constant dense<0.000000e+00> : vector<16x128xf32>
    %23 = tpu.matmul %20, %22, %cst_23 {dimension_numbers = #tpu.dot_dimension_numbers<[1], [0], [0], [1], [0, 0, 1, 1], [], []>} : vector<16x128xf32>, vector<128x128xf32>, vector<16x128xf32> -> vector<16x128xf32>
    %24 = arith.addf %17, %23 : vector<16x128xf32>
    %cst_24 = arith.constant 0.000000e+00 : f32
    %25 = vector.broadcast %cst_24 : f32 to vector<16x128xf32>
    %26 = arith.maximumf %24, %25 : vector<16x128xf32>
    %c0_25 = arith.constant 0 : index
    %c0_26 = arith.constant 0 : index
    %27 = vector.load %arg6[%c0_25, %c0_26] : memref<1x128xf32, #tpu.memory_space<vmem>>, vector<1x128xf32>
    %28 = vector.shape_cast %27 : vector<1x128xf32> to vector<1x128xf32>
    %29 = vector.broadcast %28 : vector<1x128xf32> to vector<16x128xf32>
    %c0_27 = arith.constant 0 : index
    %c0_28 = arith.constant 0 : index
    %c0_29 = arith.constant 0 : index
    %30 = vector.load %arg2[%c0_27, %c0_28, %c0_29] : memref<3x16x16xf32, #tpu.memory_space<vmem>>, vector<1x16x16xf32>
    %31 = vector.shape_cast %30 : vector<1x16x16xf32> to vector<16x16xf32>
    %cst_30 = arith.constant dense<0.000000e+00> : vector<16x128xf32>
    %32 = tpu.matmul %31, %26, %cst_30 {dimension_numbers = #tpu.dot_dimension_numbers<[1], [0], [0], [1], [0, 0, 1, 1], [], []>} : vector<16x16xf32>, vector<16x128xf32>, vector<16x128xf32> -> vector<16x128xf32>
    %c0_31 = arith.constant 0 : index
    %c0_32 = arith.constant 0 : index
    %c0_33 = arith.constant 0 : index
    %33 = vector.load %arg5[%c0_31, %c0_32, %c0_33] : memref<3x128x128xf32, #tpu.memory_space<vmem>>, vector<1x128x128xf32>
    %34 = vector.shape_cast %33 : vector<1x128x128xf32> to vector<128x128xf32>
    %cst_34 = arith.constant dense<0.000000e+00> : vector<16x128xf32>
    %35 = tpu.matmul %32, %34, %cst_34 {dimension_numbers = #tpu.dot_dimension_numbers<[1], [0], [0], [1], [0, 0, 1, 1], [], []>} : vector<16x128xf32>, vector<128x128xf32>, vector<16x128xf32> -> vector<16x128xf32>
    %36 = arith.addf %29, %35 : vector<16x128xf32>
    %c1_35 = arith.constant 1 : index
    %c0_36 = arith.constant 0 : index
    %c0_37 = arith.constant 0 : index
    %37 = vector.load %arg2[%c1_35, %c0_36, %c0_37] : memref<3x16x16xf32, #tpu.memory_space<vmem>>, vector<1x16x16xf32>
    %38 = vector.shape_cast %37 : vector<1x16x16xf32> to vector<16x16xf32>
    %cst_38 = arith.constant dense<0.000000e+00> : vector<16x128xf32>
    %39 = tpu.matmul %38, %26, %cst_38 {dimension_numbers = #tpu.dot_dimension_numbers<[1], [0], [0], [1], [0, 0, 1, 1], [], []>} : vector<16x16xf32>, vector<16x128xf32>, vector<16x128xf32> -> vector<16x128xf32>
    %c1_39 = arith.constant 1 : index
    %c0_40 = arith.constant 0 : index
    %c0_41 = arith.constant 0 : index
    %40 = vector.load %arg5[%c1_39, %c0_40, %c0_41] : memref<3x128x128xf32, #tpu.memory_space<vmem>>, vector<1x128x128xf32>
    %41 = vector.shape_cast %40 : vector<1x128x128xf32> to vector<128x128xf32>
    %cst_42 = arith.constant dense<0.000000e+00> : vector<16x128xf32>
    %42 = tpu.matmul %39, %41, %cst_42 {dimension_numbers = #tpu.dot_dimension_numbers<[1], [0], [0], [1], [0, 0, 1, 1], [], []>} : vector<16x128xf32>, vector<128x128xf32>, vector<16x128xf32> -> vector<16x128xf32>
    %43 = arith.addf %36, %42 : vector<16x128xf32>
    %c2_43 = arith.constant 2 : index
    %c0_44 = arith.constant 0 : index
    %c0_45 = arith.constant 0 : index
    %44 = vector.load %arg2[%c2_43, %c0_44, %c0_45] : memref<3x16x16xf32, #tpu.memory_space<vmem>>, vector<1x16x16xf32>
    %45 = vector.shape_cast %44 : vector<1x16x16xf32> to vector<16x16xf32>
    %cst_46 = arith.constant dense<0.000000e+00> : vector<16x128xf32>
    %46 = tpu.matmul %45, %26, %cst_46 {dimension_numbers = #tpu.dot_dimension_numbers<[1], [0], [0], [1], [0, 0, 1, 1], [], []>} : vector<16x16xf32>, vector<16x128xf32>, vector<16x128xf32> -> vector<16x128xf32>
    %c2_47 = arith.constant 2 : index
    %c0_48 = arith.constant 0 : index
    %c0_49 = arith.constant 0 : index
    %47 = vector.load %arg5[%c2_47, %c0_48, %c0_49] : memref<3x128x128xf32, #tpu.memory_space<vmem>>, vector<1x128x128xf32>
    %48 = vector.shape_cast %47 : vector<1x128x128xf32> to vector<128x128xf32>
    %cst_50 = arith.constant dense<0.000000e+00> : vector<16x128xf32>
    %49 = tpu.matmul %46, %48, %cst_50 {dimension_numbers = #tpu.dot_dimension_numbers<[1], [0], [0], [1], [0, 0, 1, 1], [], []>} : vector<16x128xf32>, vector<128x128xf32>, vector<16x128xf32> -> vector<16x128xf32>
    %50 = arith.addf %43, %49 : vector<16x128xf32>
    %cst_51 = arith.constant 1.000000e+00 : f32
    %51 = vector.broadcast %cst_51 : f32 to vector<16x128xf32>
    %52 = arith.mulf %51, %50 : vector<16x128xf32>
    %53 = arith.addf %0, %52 : vector<16x128xf32>
    %c0_52 = arith.constant 0 : index
    %c0_53 = arith.constant 0 : index
    %54 = vector.load %arg7[%c0_52, %c0_53] : memref<16x128xf32, #tpu.memory_space<vmem>>, vector<16x128xf32>
    tpu.vector_store %arg7[%c0_52, %c0_53], %53 {strides = array<i32>} : memref<16x128xf32, #tpu.memory_space<vmem>>, vector<16x128xf32>,
    return
  }
  func.func @transform_0(%arg0: i32) -> (i32, i32) {
    %c0_i32 = arith.constant 0 : i32
    %c0_i32_0 = arith.constant 0 : i32
    %c0_i32_1 = arith.constant 0 : i32
    return %c0_i32, %c0_i32_0 : i32, i32
  }
  func.func @transform_1(%arg0: i32) -> (i32, i32, i32) {
    %c0_i32 = arith.constant 0 : i32
    %c0_i32_0 = arith.constant 0 : i32
    %c0_i32_1 = arith.constant 0 : i32
    %c0_i32_2 = arith.constant 0 : i32
    return %c0_i32, %c0_i32_0, %c0_i32_1 : i32, i32, i32
  }
  func.func @transform_2(%arg0: i32) -> (i32, i32, i32) {
    %c0_i32 = arith.constant 0 : i32
    %c0_i32_0 = arith.constant 0 : i32
    %c0_i32_1 = arith.constant 0 : i32
    %c0_i32_2 = arith.constant 0 : i32
    return %c0_i32, %c0_i32_0, %c0_i32_1 : i32, i32, i32
  }
  func.func @transform_3(%arg0: i32) -> (i32, i32) {
    %c0_i32 = arith.constant 0 : i32
    %c0_i32_0 = arith.constant 0 : i32
    %c0_i32_1 = arith.constant 0 : i32
    return %c0_i32, %c0_i32_0 : i32, i32
  }
  func.func @transform_4(%arg0: i32) -> (i32, i32, i32) {
    %c0_i32 = arith.constant 0 : i32
    %c0_i32_0 = arith.constant 0 : i32
    %c0_i32_1 = arith.constant 0 : i32
    %c0_i32_2 = arith.constant 0 : i32
    return %c0_i32, %c0_i32_0, %c0_i32_1 : i32, i32, i32
  }
  func.func @transform_5(%arg0: i32) -> (i32, i32) {
    %c0_i32 = arith.constant 0 : i32
    %c0_i32_0 = arith.constant 0 : i32
    %c0_i32_1 = arith.constant 0 : i32
    return %c0_i32, %c0_i32_0 : i32, i32
  }
  func.func @transform_6(%arg0: i32) -> (i32, i32) {
    %c0_i32 = arith.constant 0 : i32
    %c0_i32_0 = arith.constant 0 : i32
    %c0_i32_1 = arith.constant 0 : i32
    return %c0_i32, %c0_i32_0 : i32, i32
  }
}

</mosaic_0001>

<llo_original>
// kernel: tile.13
$region0: #{tile.13}
  #allocation0 [shape = 's32[1]{0}', space=sflag, size = 0x4, scoped, tag = 'scoped memory for tile.13']
  %s0 = inlined_call_operand.vmem [shape: f32[4], index: 0, kind: input, shape index: {}]
  %s1 = inlined_call_operand.vmem [shape: f32[32,4], index: 1, kind: output, shape index: {}]
  // Predicated region
  $region2: #{tile.13} parent=0 // pred_check
    _
  $region3: #{tile.13} parent=0 // pred_check_branch
    %3 = sbr.rel (0) target = $region5
  $region4: #{tile.13} parent=0 // pred_region
    _
  $region5: #{tile.13} parent=0 // pred_fallthru
    _
  %v4 = vld [vmem:[%s0] ss:$0 sm:$0xff]
  %5 = vst [vmem:[%s1] sm:$0xff] %v4
  %s6 = scalar_lea.vmem %s1, 8
  %7 = vst [vmem:[%s6] sm:$0xff] %v4
  %s8 = scalar_lea.vmem %s1, 16
  %9 = vst [vmem:[%s8] sm:$0xff] %v4
  %s10 = scalar_lea.vmem %s1, 24
  %11 = vst [vmem:[%s10] sm:$0xff] %v4

// kernel: tile.14
$region0: #{tile.14}
  %s0 = inlined_call_operand.vmem [shape: f32[32,4], index: 0, kind: input, shape index: {}]
  %s1 = inlined_call_operand.vmem [shape: f32[1,128], index: 1, kind: output, shape index: {}]
  $region1: #{tile.14} parent=0
    #allocation0 [shape = 'u8[4096]{0}', space=vmem, size = 0x1000, scoped, tag = 'scoped mem for output reshape']
    %v2 = vld [vmem:[%s0] sm:$0x1]
    %vm3 = vcmask 31744
    %4 = vst.msk [vmem:[#allocation0] sm:$0x1] %vm3, %v2
    %s5 = scalar_lea.vmem %s0, 31
    %v6 = vld [vmem:[%s5] sm:$0x1]
    %7 = vrot.lane.b32.xlu0 %v6, 124
    %v8 = vpop.permute.xlu0 %7
    %vm9 = vcmask 1048544
    %10 = vst.msk [vmem:[#allocation0] sm:$0x1] %vm9, %v8
    %s11 = scalar_lea.vmem %s0, 30
    %v12 = vld [vmem:[%s11] sm:$0x1]
    %13 = vrot.lane.b32.xlu0 %v12, 120
    %v14 = vpop.permute.xlu0 %13
    %vm15 = vcmask 1015744
    %16 = vst.msk [vmem:[#allocation0] sm:$0x1] %vm15, %v14
    %s17 = scalar_lea.vmem %s0, 29
    %v18 = vld [vmem:[%s17] sm:$0x1]
    %19 = vrot.lane.b32.xlu0 %v18, 116
    %v20 = vpop.permute.xlu0 %19
    %vm21 = vcmask 982944
    %22 = vst.msk [vmem:[#allocation0] sm:$0x1] %vm21, %v20
    %s23 = scalar_lea.vmem %s0, 28
    %v24 = vld [vmem:[%s23] sm:$0x1]
    %25 = vrot.lane.b32.xlu0 %v24, 112
    %v26 = vpop.permute.xlu0 %25
    %vm27 = vcmask 950144
    %28 = vst.msk [vmem:[#allocation0] sm:$0x1] %vm27, %v26
    %s29 = scalar_lea.vmem %s0, 27
    %v30 = vld [vmem:[%s29] sm:$0x1]
    %31 = vrot.lane.b32.xlu0 %v30, 108
    %v32 = vpop.permute.xlu0 %31
    %vm33 = vcmask 917344
    %34 = vst.msk [vmem:[#allocation0] sm:$0x1] %vm33, %v32
    %s35 = scalar_lea.vmem %s0, 26
    %v36 = vld [vmem:[%s35] sm:$0x1]
    %37 = vrot.lane.b32.xlu0 %v36, 104
    %v38 = vpop.permute.xlu0 %37
    %vm39 = vcmask 884544
    %40 = vst.msk [vmem:[#allocation0] sm:$0x1] %vm39, %v38
    %s41 = scalar_lea.vmem %s0, 25
    %v42 = vld [vmem:[%s41] sm:$0x1]
    %43 = vrot.lane.b32.xlu0 %v42, 100
    %v44 = vpop.permute.xlu0 %43
    %vm45 = vcmask 851744
    %46 = vst.msk [vmem:[#allocation0] sm:$0x1] %vm45, %v44
    %s47 = scalar_lea.vmem %s0, 24
    %v48 = vld [vmem:[%s47] sm:$0x1]
    %49 = vrot.lane.b32.xlu0 %v48, 96
    %v50 = vpop.permute.xlu0 %49
    %vm51 = vcmask 818944
    %52 = vst.msk [vmem:[#allocation0] sm:$0x1] %vm51, %v50
    %s53 = scalar_lea.vmem %s0, 23
    %v54 = vld [vmem:[%s53] sm:$0x1]
    %55 = vrot.lane.b32.xlu0 %v54, 92
    %v56 = vpop.permute.xlu0 %55
    %vm57 = vcmask 786144
    %58 = vst.msk [vmem:[#allocation0] sm:$0x1] %vm57, %v56
    %s59 = scalar_lea.vmem %s0, 22
    %v60 = vld [vmem:[%s59] sm:$0x1]
    %61 = vrot.lane.b32.xlu0 %v60, 88
    %v62 = vpop.permute.xlu0 %61
    %vm63 = vcmask 753344
    %64 = vst.msk [vmem:[#allocation0] sm:$0x1] %vm63, %v62
    %s65 = scalar_lea.vmem %s0, 21
    %v66 = vld [vmem:[%s65] sm:$0x1]
    %67 = vrot.lane.b32.xlu0 %v66, 84
    %v68 = vpop.permute.xlu0 %67
    %vm69 = vcmask 720544
    %70 = vst.msk [vmem:[#allocation0] sm:$0x1] %vm69, %v68
    %s71 = scalar_lea.vmem %s0, 20
    %v72 = vld [vmem:[%s71] sm:$0x1]
    %73 = vrot.lane.b32.xlu0 %v72, 80
    %v74 = vpop.permute.xlu0 %73
    %vm75 = vcmask 687744
    %76 = vst.msk [vmem:[#allocation0] sm:$0x1] %vm75, %v74
    %s77 = scalar_lea.vmem %s0, 19
    %v78 = vld [vmem:[%s77] sm:$0x1]
    %79 = vrot.lane.b32.xlu0 %v78, 76
    %v80 = vpop.permute.xlu0 %79
    %vm81 = vcmask 654944
    %82 = vst.msk [vmem:[#allocation0] sm:$0x1] %vm81, %v80
    %s83 = scalar_lea.vmem %s0, 18
    %v84 = vld [vmem:[%s83] sm:$0x1]
    %85 = vrot.lane.b32.xlu0 %v84, 72
    %v86 = vpop.permute.xlu0 %85
    %vm87 = vcmask 622144
    %88 = vst.msk [vmem:[#allocation0] sm:$0x1] %vm87, %v86
    %s89 = scalar_lea.vmem %s0, 17
    %v90 = vld [vmem:[%s89] sm:$0x1]
    %91 = vrot.lane.b32.xlu0 %v90, 68
    %v92 = vpop.permute.xlu0 %91
    %vm93 = vcmask 589344
    %94 = vst.msk [vmem:[#allocation0] sm:$0x1] %vm93, %v92
    %s95 = scalar_lea.vmem %s0, 16
    %v96 = vld [vmem:[%s95] sm:$0x1]
    %97 = vrot.lane.b32.xlu0 %v96, 64
    %v98 = vpop.permute.xlu0 %97
    %vm99 = vcmask 556544
    %100 = vst.msk [vmem:[#allocation0] sm:$0x1] %vm99, %v98
    %s101 = scalar_lea.vmem %s0, 15
    %v102 = vld [vmem:[%s101] sm:$0x1]
    %103 = vrot.lane.b32.xlu0 %v102, 60
    %v104 = vpop.permute.xlu0 %103
    %vm105 = vcmask 523744
    %106 = vst.msk [vmem:[#allocation0] sm:$0x1] %vm105, %v104
    %s107 = scalar_lea.vmem %s0, 14
    %v108 = vld [vmem:[%s107] sm:$0x1]
    %109 = vrot.lane.b32.xlu0 %v108, 56
    %v110 = vpop.permute.xlu0 %109
    %vm111 = vcmask 490944
    %112 = vst.msk [vmem:[#allocation0] sm:$0x1] %vm111, %v110
    %s113 = scalar_lea.vmem %s0, 13
    %v114 = vld [vmem:[%s113] sm:$0x1]
    %115 = vrot.lane.b32.xlu0 %v114, 52
    %v116 = vpop.permute.xlu0 %115
    %vm117 = vcmask 458144
    %118 = vst.msk [vmem:[#allocation0] sm:$0x1] %vm117, %v116
    %s119 = scalar_lea.vmem %s0, 12
    %v120 = vld [vmem:[%s119] sm:$0x1]
    %121 = vrot.lane.b32.xlu0 %v120, 48
    %v122 = vpop.permute.xlu0 %121
    %vm123 = vcmask 425344
    %124 = vst.msk [vmem:[#allocation0] sm:$0x1] %vm123, %v122
    %s125 = scalar_lea.vmem %s0, 11
    %v126 = vld [vmem:[%s125] sm:$0x1]
    %127 = vrot.lane.b32.xlu0 %v126, 44
    %v128 = vpop.permute.xlu0 %127
    %vm129 = vcmask 392544
    %130 = vst.msk [vmem:[#allocation0] sm:$0x1] %vm129, %v128
    %s131 = scalar_lea.vmem %s0, 10
    %v132 = vld [vmem:[%s131] sm:$0x1]
    %133 = vrot.lane.b32.xlu0 %v132, 40
    %v134 = vpop.permute.xlu0 %133
    %vm135 = vcmask 359744
    %136 = vst.msk [vmem:[#allocation0] sm:$0x1] %vm135, %v134
    %s137 = scalar_lea.vmem %s0, 9
    %v138 = vld [vmem:[%s137] sm:$0x1]
    %139 = vrot.lane.b32.xlu0 %v138, 36
    %v140 = vpop.permute.xlu0 %139
    %vm141 = vcmask 326944
    %142 = vst.msk [vmem:[#allocation0] sm:$0x1] %vm141, %v140
    %s143 = scalar_lea.vmem %s0, 8
    %v144 = vld [vmem:[%s143] sm:$0x1]
    %145 = vrot.lane.b32.xlu0 %v144, 32
    %v146 = vpop.permute.xlu0 %145
    %vm147 = vcmask 294144
    %148 = vst.msk [vmem:[#allocation0] sm:$0x1] %vm147, %v146
    %s149 = scalar_lea.vmem %s0, 7
    %v150 = vld [vmem:[%s149] sm:$0x1]
    %151 = vrot.lane.b32.xlu0 %v150, 28
    %v152 = vpop.permute.xlu0 %151
    %vm153 = vcmask 261344
    %154 = vst.msk [vmem:[#allocation0] sm:$0x1] %vm153, %v152
    %s155 = scalar_lea.vmem %s0, 6
    %v156 = vld [vmem:[%s155] sm:$0x1]
    %157 = vrot.lane.b32.xlu0 %v156, 24
    %v158 = vpop.permute.xlu0 %157
    %vm159 = vcmask 228544
    %160 = vst.msk [vmem:[#allocation0] sm:$0x1] %vm159, %v158
    %s161 = scalar_lea.vmem %s0, 5
    %v162 = vld [vmem:[%s161] sm:$0x1]
    %163 = vrot.lane.b32.xlu0 %v162, 20
    %v164 = vpop.permute.xlu0 %163
    %vm165 = vcmask 195744
    %166 = vst.msk [vmem:[#allocation0] sm:$0x1] %vm165, %v164
    %s167 = scalar_lea.vmem %s0, 4
    %v168 = vld [vmem:[%s167] sm:$0x1]
    %169 = vrot.lane.b32.xlu0 %v168, 16
    %v170 = vpop.permute.xlu0 %169
    %vm171 = vcmask 162944
    %172 = vst.msk [vmem:[#allocation0] sm:$0x1] %vm171, %v170
    %s173 = scalar_lea.vmem %s0, 3
    %v174 = vld [vmem:[%s173] sm:$0x1]
    %175 = vrot.lane.b32.xlu0 %v174, 12
    %v176 = vpop.permute.xlu0 %175
    %vm177 = vcmask 130144
    %178 = vst.msk [vmem:[#allocation0] sm:$0x1] %vm177, %v176
    %s179 = scalar_lea.vmem %s0, 2
    %v180 = vld [vmem:[%s179] sm:$0x1]
    %181 = vrot.lane.b32.xlu0 %v180, 8
    %v182 = vpop.permute.xlu0 %181
    %vm183 = vcmask 97344
    %184 = vst.msk [vmem:[#allocation0] sm:$0x1] %vm183, %v182
    %s185 = scalar_lea.vmem %s0, 1
    %v186 = vld [vmem:[%s185] sm:$0x1]
    %187 = vrot.lane.b32.xlu0 %v186, 4
    %v188 = vpop.permute.xlu0 %187
    %vm189 = vcmask 64544
    %190 = vst.msk [vmem:[#allocation0] sm:$0x1] %vm189, %v188
    %s192 = sshll.u32 1, 1
    %s193 = ssub.s32 %s192, 1
    %v195 = vld [vmem:[#allocation0] sm:%s193]
    %s196 = sshll.u32 1, 1
    %s197 = ssub.s32 %s196, 1
    %198 = vst [vmem:[%s1] sm:%s197] %v195

// kernel: resblock_forward.1
$region0: #{resblock_forward.1}
  #allocation0 [shape = 'u32[]', space=smem, size = 0x4, offset = 0x4, fixed_abs, tag = 'smem constant byte address 0x4 - core index']
  #allocation1 [shape = 'u32[144,128]{1,0:T(1,128)}', space=vmem, size = 0x12000, scoped, tag = 'internal scratch']
  %s0 = inlined_call_operand.vmem [shape: f32[16,128], index: 0, kind: input, shape index: {}]
  %s1 = inlined_call_operand.vmem [shape: f32[3,16,16], index: 1, kind: input, shape index: {}]
  %s2 = inlined_call_operand.vmem [shape: f32[3,128,128], index: 2, kind: input, shape index: {}]
  %s3 = inlined_call_operand.vmem [shape: f32[1,128], index: 3, kind: input, shape index: {}]
  %s4 = inlined_call_operand.vmem [shape: f32[3,128,128], index: 4, kind: input, shape index: {}]
  %s5 = inlined_call_operand.vmem [shape: f32[1,128], index: 5, kind: input, shape index: {}]
  %s6 = inlined_call_operand.vmem [shape: f32[16,128], index: 6, kind: output, shape index: {}]
  %s7 = sld [smem:[#allocation0]]
  $region34: #{resblock_forward.1} parent=0
    _
  %s9 = ssub.s32 1, %s7
  %s10 = scalar_select 0, %s9, %s7
  // Predicated region
  $region2: #{resblock_forward.1} parent=0 // pred_check
    _
  $region3: #{resblock_forward.1} parent=0 // pred_check_branch
    %12 = sbr.rel (0) target = $region5
  $region4: #{resblock_forward.1} parent=0 // pred_region
    _
  $region5: #{resblock_forward.1} parent=0 // pred_fallthru
    _
  // Predicated region
  $region6: #{resblock_forward.1} parent=0 // pred_check
    _
  $region7: #{resblock_forward.1} parent=0 // pred_check_branch
    %14 = sbr.rel (0) target = $region9
  $region8: #{resblock_forward.1} parent=0 // pred_region
    _
  $region9: #{resblock_forward.1} parent=0 // pred_fallthru
    _
  // Predicated region
  $region10: #{resblock_forward.1} parent=0 // pred_check
    _
  $region11: #{resblock_forward.1} parent=0 // pred_check_branch
    %16 = sbr.rel (0) target = $region13
  $region12: #{resblock_forward.1} parent=0 // pred_region
    _
  $region13: #{resblock_forward.1} parent=0 // pred_fallthru
    _
  // Predicated region
  $region14: #{resblock_forward.1} parent=0 // pred_check
    _
  $region15: #{resblock_forward.1} parent=0 // pred_check_branch
    %18 = sbr.rel (0) target = $region17
  $region16: #{resblock_forward.1} parent=0 // pred_region
    _
  $region17: #{resblock_forward.1} parent=0 // pred_fallthru
    _
  // Predicated region
  $region18: #{resblock_forward.1} parent=0 // pred_check
    _
  $region19: #{resblock_forward.1} parent=0 // pred_check_branch
    %20 = sbr.rel (0) target = $region21
  $region20: #{resblock_forward.1} parent=0 // pred_region
    _
  $region21: #{resblock_forward.1} parent=0 // pred_fallthru
    _
  // Predicated region
  $region22: #{resblock_forward.1} parent=0 // pred_check
    _
  $region23: #{resblock_forward.1} parent=0 // pred_check_branch
    %22 = sbr.rel (0) target = $region25
  $region24: #{resblock_forward.1} parent=0 // pred_region
    _
  $region25: #{resblock_forward.1} parent=0 // pred_fallthru
    _
  %v23 = vld [vmem:[%s0] sm:$0xff]
  %v24 = vld [vmem:[%s0 + $0x8] sm:$0xff]
  %v25 = vld [vmem:[%s3] sm:$0x1]
  %v27 = vlaneseq
  %v28 = vshrl.u32 %v27, 7
  %v29 = vsub.s32 0, %v28
  %v30 = vrot.slane %v25, %v29
  %v32 = vld [vmem:[%s1] sm:$0xff]
  %v33 = vld [vmem:[%s1 + $0x8] sm:$0xff]
  %vm34 = vcmask 130048
  %v36 = vsel %vm34, %v32, 0
  %v39 = vsel %vm34, %v33, 0
  %41 = vmatprep.subr.mxu0 0.0
  %42 = vmatpush1.msra.mxu0 0.0
  %43 = vmatprep.subr.mxu0 0.0
  %44 = vmatpush1.msra.mxu0 0.0
  %45 = vmatprep.subr.mxu0 0.0
  %46 = vmatpush1.msra.mxu0 0.0
  %47 = vmatprep.subr.mxu0 0.0
  %48 = vmatpush1.msra.mxu0 0.0
  %49 = vmatprep.subr.mxu0 0.0
  %50 = vmatpush1.msra.mxu0 0.0
  %51 = vmatprep.subr.mxu0 0.0
  %52 = vmatpush1.msra.mxu0 0.0
  %53 = vmatprep.subr.mxu0 0.0
  %54 = vmatpush1.msra.mxu0 0.0
  %55 = vmatprep.subr.mxu0 0.0
  %56 = vmatpush1.msra.mxu0 0.0
  %57 = vmatprep.subr.mxu0 0.0
  %58 = vmatpush1.msra.mxu0 0.0
  %59 = vmatprep.subr.mxu0 0.0
  %60 = vmatpush1.msra.mxu0 0.0
  %61 = vmatprep.subr.mxu0 0.0
  %62 = vmatpush1.msra.mxu0 0.0
  %63 = vmatprep.subr.mxu0 0.0
  %64 = vmatpush1.msra.mxu0 0.0
  %65 = vmatprep.subr.mxu0 0.0
  %66 = vmatpush1.msra.mxu0 0.0
  %67 = vmatprep.subr.mxu0 0.0
  %68 = vmatpush1.msra.mxu0 0.0
  %69 = vmatprep.subr.mxu0 0.0
  %70 = vmatpush1.msra.mxu0 %v24
  %71 = vmatprep.subr.mxu0 0.0
  %72 = vmatpush1.msra.mxu0 %v23
  %73 = vmatprep.subr.mxu0 0.0
  %74 = vmatpush2.msra.mxu0 0.0
  %75 = vmatprep.subr.mxu0 0.0
  %76 = vmatpush2.msra.mxu0 0.0
  %77 = vmatprep.subr.mxu0 0.0
  %78 = vmatpush2.msra.mxu0 0.0
  %79 = vmatprep.subr.mxu0 0.0
  %80 = vmatpush2.msra.mxu0 0.0
  %81 = vmatprep.subr.mxu0 0.0
  %82 = vmatpush2.msra.mxu0 0.0
  %83 = vmatprep.subr.mxu0 0.0
  %84 = vmatpush2.msra.mxu0 0.0
  %85 = vmatprep.subr.mxu0 0.0
  %86 = vmatpush2.msra.mxu0 0.0
  %87 = vmatprep.subr.mxu0 0.0
  %88 = vmatpush2.msra.mxu0 0.0
  %89 = vmatprep.subr.mxu0 0.0
  %90 = vmatpush2.msra.mxu0 0.0
  %91 = vmatprep.subr.mxu0 0.0
  %92 = vmatpush2.msra.mxu0 0.0
  %93 = vmatprep.subr.mxu0 0.0
  %94 = vmatpush2.msra.mxu0 0.0
  %95 = vmatprep.subr.mxu0 0.0
  %96 = vmatpush2.msra.mxu0 0.0
  %97 = vmatprep.subr.mxu0 0.0
  %98 = vmatpush2.msra.mxu0 0.0
  %99 = vmatprep.subr.mxu0 0.0
  %100 = vmatpush2.msra.mxu0 0.0
  %101 = vmatprep.subr.mxu0 0.0
  %102 = vmatpush2.msra.mxu0 0.0
  %103 = vmatprep.subr.mxu0 0.0
  %104 = vmatpush2.msra.mxu0 0.0
  %105 = vmatprep.mubr.f32.mxu0 0.0
  %106 = vmatmul.mubr.f32.gmra.mxu0 %v36
  %v107 = vpop.f32.mrf.mxu0
  %v108 = vadd.f32 0.0, %v107
  %v109 = vpop.f32.mrf.mxu0
  %110 = vmatprep.mubr.f32.mxu0 0.0
  %111 = vmatmul.mubr.f32.gmra.mxu0 %v39
  %v112 = vpop.f32.mrf.mxu0
  %v113 = vadd.f32 0.0, %v112
  %v114 = vpop.f32.mrf.mxu0
  %115 = vdwg.mxu0
  %v116 = vld [vmem:[%s2] sm:$0xff]
  %v117 = vld [vmem:[%s2 + $0x8] sm:$0xff]
  %v118 = vld [vmem:[%s2 + $0x10] sm:$0xff]
  %v119 = vld [vmem:[%s2 + $0x18] sm:$0xff]
  %v120 = vld [vmem:[%s2 + $0x20] sm:$0xff]
  %v121 = vld [vmem:[%s2 + $0x28] sm:$0xff]
  %v122 = vld [vmem:[%s2 + $0x30] sm:$0xff]
  %v123 = vld [vmem:[%s2 + $0x38] sm:$0xff]
  %v124 = vld [vmem:[%s2 + $0x40] sm:$0xff]
  %v125 = vld [vmem:[%s2 + $0x48] sm:$0xff]
  %v126 = vld [vmem:[%s2 + $0x50] sm:$0xff]
  %v127 = vld [vmem:[%s2 + $0x58] sm:$0xff]
  %v128 = vld [vmem:[%s2 + $0x60] sm:$0xff]
  %v129 = vld [vmem:[%s2 + $0x68] sm:$0xff]
  %v130 = vld [vmem:[%s2 + $0x70] sm:$0xff]
  %v131 = vld [vmem:[%s2 + $0x78] sm:$0xff]
  %132 = vmatprep.subr.mxu0 0.0
  %133 = vmatpush1.msra.mxu0 %v131
  %134 = vmatprep.subr.mxu0 0.0
  %135 = vmatpush1.msra.mxu0 %v130
  %136 = vmatprep.subr.mxu0 0.0
  %137 = vmatpush1.msra.mxu0 %v129
  %138 = vmatprep.subr.mxu0 0.0
  %139 = vmatpush1.msra.mxu0 %v128
  %140 = vmatprep.subr.mxu0 0.0
  %141 = vmatpush1.msra.mxu0 %v127
  %142 = vmatprep.subr.mxu0 0.0
  %143 = vmatpush1.msra.mxu0 %v126
  %144 = vmatprep.subr.mxu0 0.0
  %145 = vmatpush1.msra.mxu0 %v125
  %146 = vmatprep.subr.mxu0 0.0
  %147 = vmatpush1.msra.mxu0 %v124
  %148 = vmatprep.subr.mxu0 0.0
  %149 = vmatpush1.msra.mxu0 %v123
  %150 = vmatprep.subr.mxu0 0.0
  %151 = vmatpush1.msra.mxu0 %v122
  %152 = vmatprep.subr.mxu0 0.0
  %153 = vmatpush1.msra.mxu0 %v121
  %154 = vmatprep.subr.mxu0 0.0
  %155 = vmatpush1.msra.mxu0 %v120
  %156 = vmatprep.subr.mxu0 0.0
  %157 = vmatpush1.msra.mxu0 %v119
  %158 = vmatprep.subr.mxu0 0.0
  %159 = vmatpush1.msra.mxu0 %v118
  %160 = vmatprep.subr.mxu0 0.0
  %161 = vmatpush1.msra.mxu0 %v117
  %162 = vmatprep.subr.mxu0 0.0
  %163 = vmatpush1.msra.mxu0 %v116
  %164 = vmatprep.subr.mxu0 0.0
  %165 = vmatpush2.msra.mxu0 0.0
  %166 = vmatprep.subr.mxu0 0.0
  %167 = vmatpush2.msra.mxu0 0.0
  %168 = vmatprep.subr.mxu0 0.0
  %169 = vmatpush2.msra.mxu0 0.0
  %170 = vmatprep.subr.mxu0 0.0
  %171 = vmatpush2.msra.mxu0 0.0
  %172 = vmatprep.subr.mxu0 0.0
  %173 = vmatpush2.msra.mxu0 0.0
  %174 = vmatprep.subr.mxu0 0.0
  %175 = vmatpush2.msra.mxu0 0.0
  %176 = vmatprep.subr.mxu0 0.0
  %177 = vmatpush2.msra.mxu0 0.0
  %178 = vmatprep.subr.mxu0 0.0
  %179 = vmatpush2.msra.mxu0 0.0
  %180 = vmatprep.subr.mxu0 0.0
  %181 = vmatpush2.msra.mxu0 0.0
  %182 = vmatprep.subr.mxu0 0.0
  %183 = vmatpush2.msra.mxu0 0.0
  %184 = vmatprep.subr.mxu0 0.0
  %185 = vmatpush2.msra.mxu0 0.0
  %186 = vmatprep.subr.mxu0 0.0
  %187 = vmatpush2.msra.mxu0 0.0
  %188 = vmatprep.subr.mxu0 0.0
  %189 = vmatpush2.msra.mxu0 0.0
  %190 = vmatprep.subr.mxu0 0.0
  %191 = vmatpush2.msra.mxu0 0.0
  %192 = vmatprep.subr.mxu0 0.0
  %193 = vmatpush2.msra.mxu0 0.0
  %194 = vmatprep.subr.mxu0 0.0
  %195 = vmatpush2.msra.mxu0 0.0
  %196 = vmatprep.mubr.f32.mxu0 0.0
  %197 = vmatmul.mubr.f32.gmra.mxu0 %v108
  %v198 = vpop.f32.mrf.mxu0
  %v199 = vadd.f32 0.0, %v198
  %v200 = vpop.f32.mrf.mxu0
  %201 = vmatprep.mubr.f32.mxu0 0.0
  %202 = vmatmul.mubr.f32.gmra.mxu0 %v113
  %v203 = vpop.f32.mrf.mxu0
  %v204 = vadd.f32 0.0, %v203
  %v205 = vpop.f32.mrf.mxu0
  %206 = vdwg.mxu0
  %v207 = vadd.f32 %v30, %v199
  %v208 = vadd.f32 %v30, %v204
  %s209 = scalar_lea.vmem %s1, 16
  %v210 = vld [vmem:[%s209] sm:$0xff]
  %v211 = vld [vmem:[%s209 + $0x8] sm:$0xff]
  %v213 = vsel %vm34, %v210, 0
  %v216 = vsel %vm34, %v211, 0
  %218 = vmatprep.subr.mxu0 0.0
  %219 = vmatpush1.msra.mxu0 0.0
  %220 = vmatprep.subr.mxu0 0.0
  %221 = vmatpush1.msra.mxu0 0.0
  %222 = vmatprep.subr.mxu0 0.0
  %223 = vmatpush1.msra.mxu0 0.0
  %224 = vmatprep.subr.mxu0 0.0
  %225 = vmatpush1.msra.mxu0 0.0
  %226 = vmatprep.subr.mxu0 0.0
  %227 = vmatpush1.msra.mxu0 0.0
  %228 = vmatprep.subr.mxu0 0.0
  %229 = vmatpush1.msra.mxu0 0.0
  %230 = vmatprep.subr.mxu0 0.0
  %231 = vmatpush1.msra.mxu0 0.0
  %232 = vmatprep.subr.mxu0 0.0
  %233 = vmatpush1.msra.mxu0 0.0
  %234 = vmatprep.subr.mxu0 0.0
  %235 = vmatpush1.msra.mxu0 0.0
  %236 = vmatprep.subr.mxu0 0.0
  %237 = vmatpush1.msra.mxu0 0.0
  %238 = vmatprep.subr.mxu0 0.0
  %239 = vmatpush1.msra.mxu0 0.0
  %240 = vmatprep.subr.mxu0 0.0
  %241 = vmatpush1.msra.mxu0 0.0
  %242 = vmatprep.subr.mxu0 0.0
  %243 = vmatpush1.msra.mxu0 0.0
  %244 = vmatprep.subr.mxu0 0.0
  %245 = vmatpush1.msra.mxu0 0.0
  %246 = vmatprep.subr.mxu0 0.0
  %247 = vmatpush1.msra.mxu0 %v24
  %248 = vmatprep.subr.mxu0 0.0
  %249 = vmatpush1.msra.mxu0 %v23
  %250 = vmatprep.subr.mxu0 0.0
  %251 = vmatpush2.msra.mxu0 0.0
  %252 = vmatprep.subr.mxu0 0.0
  %253 = vmatpush2.msra.mxu0 0.0
  %254 = vmatprep.subr.mxu0 0.0
  %255 = vmatpush2.msra.mxu0 0.0
  %256 = vmatprep.subr.mxu0 0.0
  %257 = vmatpush2.msra.mxu0 0.0
  %258 = vmatprep.subr.mxu0 0.0
  %259 = vmatpush2.msra.mxu0 0.0
  %260 = vmatprep.subr.mxu0 0.0
  %261 = vmatpush2.msra.mxu0 0.0
  %262 = vmatprep.subr.mxu0 0.0
  %263 = vmatpush2.msra.mxu0 0.0
  %264 = vmatprep.subr.mxu0 0.0
  %265 = vmatpush2.msra.mxu0 0.0
  %266 = vmatprep.subr.mxu0 0.0
  %267 = vmatpush2.msra.mxu0 0.0
  %268 = vmatprep.subr.mxu0 0.0
  %269 = vmatpush2.msra.mxu0 0.0
  %270 = vmatprep.subr.mxu0 0.0
  %271 = vmatpush2.msra.mxu0 0.0
  %272 = vmatprep.subr.mxu0 0.0
  %273 = vmatpush2.msra.mxu0 0.0
  %274 = vmatprep.subr.mxu0 0.0
  %275 = vmatpush2.msra.mxu0 0.0
  %276 = vmatprep.subr.mxu0 0.0
  %277 = vmatpush2.msra.mxu0 0.0
  %278 = vmatprep.subr.mxu0 0.0
  %279 = vmatpush2.msra.mxu0 0.0
  %280 = vmatprep.subr.mxu0 0.0
  %281 = vmatpush2.msra.mxu0 0.0
  %282 = vmatprep.mubr.f32.mxu0 0.0
  %283 = vmatmul.mubr.f32.gmra.mxu0 %v213
  %v284 = vpop.f32.mrf.mxu0
  %v285 = vadd.f32 0.0, %v284
  %v286 = vpop.f32.mrf.mxu0
  %287 = vmatprep.mubr.f32.mxu0 0.0
  %288 = vmatmul.mubr.f32.gmra.mxu0 %v216
  %v289 = vpop.f32.mrf.mxu0
  %v290 = vadd.f32 0.0, %v289
  %v291 = vpop.f32.mrf.mxu0
  %292 = vdwg.mxu0
  %s293 = scalar_lea.vmem %s2, 128
  %v294 = vld [vmem:[%s293] sm:$0xff]
  %v295 = vld [vmem:[%s293 + $0x8] sm:$0xff]
  %v296 = vld [vmem:[%s293 + $0x10] sm:$0xff]
  %v297 = vld [vmem:[%s293 + $0x18] sm:$0xff]
  %v298 = vld [vmem:[%s293 + $0x20] sm:$0xff]
  %v299 = vld [vmem:[%s293 + $0x28] sm:$0xff]
  %v300 = vld [vmem:[%s293 + $0x30] sm:$0xff]
  %v301 = vld [vmem:[%s293 + $0x38] sm:$0xff]
  %v302 = vld [vmem:[%s293 + $0x40] sm:$0xff]
  %v303 = vld [vmem:[%s293 + $0x48] sm:$0xff]
  %v304 = vld [vmem:[%s293 + $0x50] sm:$0xff]
  %v305 = vld [vmem:[%s293 + $0x58] sm:$0xff]
  %v306 = vld [vmem:[%s293 + $0x60] sm:$0xff]
  %v307 = vld [vmem:[%s293 + $0x68] sm:$0xff]
  %v308 = vld [vmem:[%s293 + $0x70] sm:$0xff]
  %v309 = vld [vmem:[%s293 + $0x78] sm:$0xff]
  %310 = vmatprep.subr.mxu0 0.0
  %311 = vmatpush1.msra.mxu0 %v309
  %312 = vmatprep.subr.mxu0 0.0
  %313 = vmatpush1.msra.mxu0 %v308
  %314 = vmatprep.subr.mxu0 0.0
  %315 = vmatpush1.msra.mxu0 %v307
  %316 = vmatprep.subr.mxu0 0.0
  %317 = vmatpush1.msra.mxu0 %v306
  %318 = vmatprep.subr.mxu0 0.0
  %319 = vmatpush1.msra.mxu0 %v305
  %320 = vmatprep.subr.mxu0 0.0
  %321 = vmatpush1.msra.mxu0 %v304
  %322 = vmatprep.subr.mxu0 0.0
  %323 = vmatpush1.msra.mxu0 %v303
  %324 = vmatprep.subr.mxu0 0.0
  %325 = vmatpush1.msra.mxu0 %v302
  %326 = vmatprep.subr.mxu0 0.0
  %327 = vmatpush1.msra.mxu0 %v301
  %328 = vmatprep.subr.mxu0 0.0
  %329 = vmatpush1.msra.mxu0 %v300
  %330 = vmatprep.subr.mxu0 0.0
  %331 = vmatpush1.msra.mxu0 %v299
  %332 = vmatprep.subr.mxu0 0.0
  %333 = vmatpush1.msra.mxu0 %v298
  %334 = vmatprep.subr.mxu0 0.0
  %335 = vmatpush1.msra.mxu0 %v297
  %336 = vmatprep.subr.mxu0 0.0
  %337 = vmatpush1.msra.mxu0 %v296
  %338 = vmatprep.subr.mxu0 0.0
  %339 = vmatpush1.msra.mxu0 %v295
  %340 = vmatprep.subr.mxu0 0.0
  %341 = vmatpush1.msra.mxu0 %v294
  %342 = vmatprep.subr.mxu0 0.0
  %343 = vmatpush2.msra.mxu0 0.0
  %344 = vmatprep.subr.mxu0 0.0
  %345 = vmatpush2.msra.mxu0 0.0
  %346 = vmatprep.subr.mxu0 0.0
  %347 = vmatpush2.msra.mxu0 0.0
  %348 = vmatprep.subr.mxu0 0.0
  %349 = vmatpush2.msra.mxu0 0.0
  %350 = vmatprep.subr.mxu0 0.0
  %351 = vmatpush2.msra.mxu0 0.0
  %352 = vmatprep.subr.mxu0 0.0
  %353 = vmatpush2.msra.mxu0 0.0
  %354 = vmatprep.subr.mxu0 0.0
  %355 = vmatpush2.msra.mxu0 0.0
  %356 = vmatprep.subr.mxu0 0.0
  %357 = vmatpush2.msra.mxu0 0.0
  %358 = vmatprep.subr.mxu0 0.0
  %359 = vmatpush2.msra.mxu0 0.0
  %360 = vmatprep.subr.mxu0 0.0
  %361 = vmatpush2.msra.mxu0 0.0
  %362 = vmatprep.subr.mxu0 0.0
  %363 = vmatpush2.msra.mxu0 0.0
  %364 = vmatprep.subr.mxu0 0.0
  %365 = vmatpush2.msra.mxu0 0.0
  %366 = vmatprep.subr.mxu0 0.0
  %367 = vmatpush2.msra.mxu0 0.0
  %368 = vmatprep.subr.mxu0 0.0
  %369 = vmatpush2.msra.mxu0 0.0
  %370 = vmatprep.subr.mxu0 0.0
  %371 = vmatpush2.msra.mxu0 0.0
  %372 = vmatprep.subr.mxu0 0.0
  %373 = vmatpush2.msra.mxu0 0.0
  %374 = vmatprep.mubr.f32.mxu0 0.0
  %375 = vmatmul.mubr.f32.gmra.mxu0 %v285
  %v376 = vpop.f32.mrf.mxu0
  %v377 = vadd.f32 0.0, %v376
  %v378 = vpop.f32.mrf.mxu0
  %379 = vmatprep.mubr.f32.mxu0 0.0
  %380 = vmatmul.mubr.f32.gmra.mxu0 %v290
  %v381 = vpop.f32.mrf.mxu0
  %v382 = vadd.f32 0.0, %v381
  %v383 = vpop.f32.mrf.mxu0
  %384 = vdwg.mxu0
  %v385 = vadd.f32 %v207, %v377
  %v386 = vadd.f32 %v208, %v382
  %s387 = scalar_lea.vmem %s1, 32
  %v388 = vld [vmem:[%s387] sm:$0xff]
  %v389 = vld [vmem:[%s387 + $0x8] sm:$0xff]
  %v391 = vsel %vm34, %v388, 0
  %v394 = vsel %vm34, %v389, 0
  %396 = vmatprep.subr.mxu0 0.0
  %397 = vmatpush1.msra.mxu0 0.0
  %398 = vmatprep.subr.mxu0 0.0
  %399 = vmatpush1.msra.mxu0 0.0
  %400 = vmatprep.subr.mxu0 0.0
  %401 = vmatpush1.msra.mxu0 0.0
  %402 = vmatprep.subr.mxu0 0.0
  %403 = vmatpush1.msra.mxu0 0.0
  %404 = vmatprep.subr.mxu0 0.0
  %405 = vmatpush1.msra.mxu0 0.0
  %406 = vmatprep.subr.mxu0 0.0
  %407 = vmatpush1.msra.mxu0 0.0
  %408 = vmatprep.subr.mxu0 0.0
  %409 = vmatpush1.msra.mxu0 0.0
  %410 = vmatprep.subr.mxu0 0.0
  %411 = vmatpush1.msra.mxu0 0.0
  %412 = vmatprep.subr.mxu0 0.0
  %413 = vmatpush1.msra.mxu0 0.0
  %414 = vmatprep.subr.mxu0 0.0
  %415 = vmatpush1.msra.mxu0 0.0
  %416 = vmatprep.subr.mxu0 0.0
  %417 = vmatpush1.msra.mxu0 0.0
  %418 = vmatprep.subr.mxu0 0.0
  %419 = vmatpush1.msra.mxu0 0.0
  %420 = vmatprep.subr.mxu0 0.0
  %421 = vmatpush1.msra.mxu0 0.0
  %422 = vmatprep.subr.mxu0 0.0
  %423 = vmatpush1.msra.mxu0 0.0
  %424 = vmatprep.subr.mxu0 0.0
  %425 = vmatpush1.msra.mxu0 %v24
  %426 = vmatprep.subr.mxu0 0.0
  %427 = vmatpush1.msra.mxu0 %v23
  %428 = vmatprep.subr.mxu0 0.0
  %429 = vmatpush2.msra.mxu0 0.0
  %430 = vmatprep.subr.mxu0 0.0
  %431 = vmatpush2.msra.mxu0 0.0
  %432 = vmatprep.subr.mxu0 0.0
  %433 = vmatpush2.msra.mxu0 0.0
  %434 = vmatprep.subr.mxu0 0.0
  %435 = vmatpush2.msra.mxu0 0.0
  %436 = vmatprep.subr.mxu0 0.0
  %437 = vmatpush2.msra.mxu0 0.0
  %438 = vmatprep.subr.mxu0 0.0
  %439 = vmatpush2.msra.mxu0 0.0
  %440 = vmatprep.subr.mxu0 0.0
  %441 = vmatpush2.msra.mxu0 0.0
  %442 = vmatprep.subr.mxu0 0.0
  %443 = vmatpush2.msra.mxu0 0.0
  %444 = vmatprep.subr.mxu0 0.0
  %445 = vmatpush2.msra.mxu0 0.0
  %446 = vmatprep.subr.mxu0 0.0
  %447 = vmatpush2.msra.mxu0 0.0
  %448 = vmatprep.subr.mxu0 0.0
  %449 = vmatpush2.msra.mxu0 0.0
  %450 = vmatprep.subr.mxu0 0.0
  %451 = vmatpush2.msra.mxu0 0.0
  %452 = vmatprep.subr.mxu0 0.0
  %453 = vmatpush2.msra.mxu0 0.0
  %454 = vmatprep.subr.mxu0 0.0
  %455 = vmatpush2.msra.mxu0 0.0
  %456 = vmatprep.subr.mxu0 0.0
  %457 = vmatpush2.msra.mxu0 0.0
  %458 = vmatprep.subr.mxu0 0.0
  %459 = vmatpush2.msra.mxu0 0.0
  %460 = vmatprep.mubr.f32.mxu0 0.0
  %461 = vmatmul.mubr.f32.gmra.mxu0 %v391
  %v462 = vpop.f32.mrf.mxu0
  %v463 = vadd.f32 0.0, %v462
  %v464 = vpop.f32.mrf.mxu0
  %465 = vmatprep.mubr.f32.mxu0 0.0
  %466 = vmatmul.mubr.f32.gmra.mxu0 %v394
  %v467 = vpop.f32.mrf.mxu0
  %v468 = vadd.f32 0.0, %v467
  %v469 = vpop.f32.mrf.mxu0
  %470 = vdwg.mxu0
  %s471 = scalar_lea.vmem %s2, 256
  %v472 = vld [vmem:[%s471] sm:$0xff]
  %v473 = vld [vmem:[%s471 + $0x8] sm:$0xff]
  %v474 = vld [vmem:[%s471 + $0x10] sm:$0xff]
  %v475 = vld [vmem:[%s471 + $0x18] sm:$0xff]
  %v476 = vld [vmem:[%s471 + $0x20] sm:$0xff]
  %v477 = vld [vmem:[%s471 + $0x28] sm:$0xff]
  %v478 = vld [vmem:[%s471 + $0x30] sm:$0xff]
  %v479 = vld [vmem:[%s471 + $0x38] sm:$0xff]
  %v480 = vld [vmem:[%s471 + $0x40] sm:$0xff]
  %v481 = vld [vmem:[%s471 + $0x48] sm:$0xff]
  %v482 = vld [vmem:[%s471 + $0x50] sm:$0xff]
  %v483 = vld [vmem:[%s471 + $0x58] sm:$0xff]
  %v484 = vld [vmem:[%s471 + $0x60] sm:$0xff]
  %v485 = vld [vmem:[%s471 + $0x68] sm:$0xff]
  %v486 = vld [vmem:[%s471 + $0x70] sm:$0xff]
  %v487 = vld [vmem:[%s471 + $0x78] sm:$0xff]
  %488 = vmatprep.subr.mxu0 0.0
  %489 = vmatpush1.msra.mxu0 %v487
  %490 = vmatprep.subr.mxu0 0.0
  %491 = vmatpush1.msra.mxu0 %v486
  %492 = vmatprep.subr.mxu0 0.0
  %493 = vmatpush1.msra.mxu0 %v485
  %494 = vmatprep.subr.mxu0 0.0
  %495 = vmatpush1.msra.mxu0 %v484
  %496 = vmatprep.subr.mxu0 0.0
  %497 = vmatpush1.msra.mxu0 %v483
  %498 = vmatprep.subr.mxu0 0.0
  %499 = vmatpush1.msra.mxu0 %v482
  %500 = vmatprep.subr.mxu0 0.0
  %501 = vmatpush1.msra.mxu0 %v481
  %502 = vmatprep.subr.mxu0 0.0
  %503 = vmatpush1.msra.mxu0 %v480
  %504 = vmatprep.subr.mxu0 0.0
  %505 = vmatpush1.msra.mxu0 %v479
  %506 = vmatprep.subr.mxu0 0.0
  %507 = vmatpush1.msra.mxu0 %v478
  %508 = vmatprep.subr.mxu0 0.0
  %509 = vmatpush1.msra.mxu0 %v477
  %510 = vmatprep.subr.mxu0 0.0
  %511 = vmatpush1.msra.mxu0 %v476
  %512 = vmatprep.subr.mxu0 0.0
  %513 = vmatpush1.msra.mxu0 %v475
  %514 = vmatprep.subr.mxu0 0.0
  %515 = vmatpush1.msra.mxu0 %v474
  %516 = vmatprep.subr.mxu0 0.0
  %517 = vmatpush1.msra.mxu0 %v473
  %518 = vmatprep.subr.mxu0 0.0
  %519 = vmatpush1.msra.mxu0 %v472
  %520 = vmatprep.subr.mxu0 0.0
  %521 = vmatpush2.msra.mxu0 0.0
  %522 = vmatprep.subr.mxu0 0.0
  %523 = vmatpush2.msra.mxu0 0.0
  %524 = vmatprep.subr.mxu0 0.0
  %525 = vmatpush2.msra.mxu0 0.0
  %526 = vmatprep.subr.mxu0 0.0
  %527 = vmatpush2.msra.mxu0 0.0
  %528 = vmatprep.subr.mxu0 0.0
  %529 = vmatpush2.msra.mxu0 0.0
  %530 = vmatprep.subr.mxu0 0.0
  %531 = vmatpush2.msra.mxu0 0.0
  %532 = vmatprep.subr.mxu0 0.0
  %533 = vmatpush2.msra.mxu0 0.0
  %534 = vmatprep.subr.mxu0 0.0
  %535 = vmatpush2.msra.mxu0 0.0
  %536 = vmatprep.subr.mxu0 0.0
  %537 = vmatpush2.msra.mxu0 0.0
  %538 = vmatprep.subr.mxu0 0.0
  %539 = vmatpush2.msra.mxu0 0.0
  %540 = vmatprep.subr.mxu0 0.0
  %541 = vmatpush2.msra.mxu0 0.0
  %542 = vmatprep.subr.mxu0 0.0
  %543 = vmatpush2.msra.mxu0 0.0
  %544 = vmatprep.subr.mxu0 0.0
  %545 = vmatpush2.msra.mxu0 0.0
  %546 = vmatprep.subr.mxu0 0.0
  %547 = vmatpush2.msra.mxu0 0.0
  %548 = vmatprep.subr.mxu0 0.0
  %549 = vmatpush2.msra.mxu0 0.0
  %550 = vmatprep.subr.mxu0 0.0
  %551 = vmatpush2.msra.mxu0 0.0
  %552 = vmatprep.mubr.f32.mxu0 0.0
  %553 = vmatmul.mubr.f32.gmra.mxu0 %v463
  %v554 = vpop.f32.mrf.mxu0
  %v555 = vadd.f32 0.0, %v554
  %v556 = vpop.f32.mrf.mxu0
  %557 = vmatprep.mubr.f32.mxu0 0.0
  %558 = vmatmul.mubr.f32.gmra.mxu0 %v468
  %v559 = vpop.f32.mrf.mxu0
  %v560 = vadd.f32 0.0, %v559
  %v561 = vpop.f32.mrf.mxu0
  %562 = vdwg.mxu0
  %v563 = vadd.f32 %v385, %v555
  %v564 = vadd.f32 %v386, %v560
  %v565 = vmax.f32 %v563, 0.0
  %v566 = vmax.f32 %v564, 0.0
  %v567 = vld [vmem:[%s5] sm:$0x1]
  %v569 = vlaneseq
  %v570 = vshrl.u32 %v569, 7
  %v571 = vsub.s32 0, %v570
  %v572 = vrot.slane %v567, %v571
  %574 = vmatprep.subr.mxu0 0.0
  %575 = vmatpush1.msra.mxu0 0.0
  %576 = vmatprep.subr.mxu0 0.0
  %577 = vmatpush1.msra.mxu0 0.0
  %578 = vmatprep.subr.mxu0 0.0
  %579 = vmatpush1.msra.mxu0 0.0
  %580 = vmatprep.subr.mxu0 0.0
  %581 = vmatpush1.msra.mxu0 0.0
  %582 = vmatprep.subr.mxu0 0.0
  %583 = vmatpush1.msra.mxu0 0.0
  %584 = vmatprep.subr.mxu0 0.0
  %585 = vmatpush1.msra.mxu0 0.0
  %586 = vmatprep.subr.mxu0 0.0
  %587 = vmatpush1.msra.mxu0 0.0
  %588 = vmatprep.subr.mxu0 0.0
  %589 = vmatpush1.msra.mxu0 0.0
  %590 = vmatprep.subr.mxu0 0.0
  %591 = vmatpush1.msra.mxu0 0.0
  %592 = vmatprep.subr.mxu0 0.0
  %593 = vmatpush1.msra.mxu0 0.0
  %594 = vmatprep.subr.mxu0 0.0
  %595 = vmatpush1.msra.mxu0 0.0
  %596 = vmatprep.subr.mxu0 0.0
  %597 = vmatpush1.msra.mxu0 0.0
  %598 = vmatprep.subr.mxu0 0.0
  %599 = vmatpush1.msra.mxu0 0.0
  %600 = vmatprep.subr.mxu0 0.0
  %601 = vmatpush1.msra.mxu0 0.0
  %602 = vmatprep.subr.mxu0 0.0
  %603 = vmatpush1.msra.mxu0 %v566
  %604 = vmatprep.subr.mxu0 0.0
  %605 = vmatpush1.msra.mxu0 %v565
  %606 = vmatprep.subr.mxu0 0.0
  %607 = vmatpush2.msra.mxu0 0.0
  %608 = vmatprep.subr.mxu0 0.0
  %609 = vmatpush2.msra.mxu0 0.0
  %610 = vmatprep.subr.mxu0 0.0
  %611 = vmatpush2.msra.mxu0 0.0
  %612 = vmatprep.subr.mxu0 0.0
  %613 = vmatpush2.msra.mxu0 0.0
  %614 = vmatprep.subr.mxu0 0.0
  %615 = vmatpush2.msra.mxu0 0.0
  %616 = vmatprep.subr.mxu0 0.0
  %617 = vmatpush2.msra.mxu0 0.0
  %618 = vmatprep.subr.mxu0 0.0
  %619 = vmatpush2.msra.mxu0 0.0
  %620 = vmatprep.subr.mxu0 0.0
  %621 = vmatpush2.msra.mxu0 0.0
  %622 = vmatprep.subr.mxu0 0.0
  %623 = vmatpush2.msra.mxu0 0.0
  %624 = vmatprep.subr.mxu0 0.0
  %625 = vmatpush2.msra.mxu0 0.0
  %626 = vmatprep.subr.mxu0 0.0
  %627 = vmatpush2.msra.mxu0 0.0
  %628 = vmatprep.subr.mxu0 0.0
  %629 = vmatpush2.msra.mxu0 0.0
  %630 = vmatprep.subr.mxu0 0.0
  %631 = vmatpush2.msra.mxu0 0.0
  %632 = vmatprep.subr.mxu0 0.0
  %633 = vmatpush2.msra.mxu0 0.0
  %634 = vmatprep.subr.mxu0 0.0
  %635 = vmatpush2.msra.mxu0 0.0
  %636 = vmatprep.subr.mxu0 0.0
  %637 = vmatpush2.msra.mxu0 0.0
  %638 = vmatprep.mubr.f32.mxu0 0.0
  %639 = vmatmul.mubr.f32.gmra.mxu0 %v36
  %v640 = vpop.f32.mrf.mxu0
  %v641 = vadd.f32 0.0, %v640
  %v642 = vpop.f32.mrf.mxu0
  %643 = vmatprep.mubr.f32.mxu0 0.0
  %644 = vmatmul.mubr.f32.gmra.mxu0 %v39
  %v645 = vpop.f32.mrf.mxu0
  %v646 = vadd.f32 0.0, %v645
  %v647 = vpop.f32.mrf.mxu0
  %648 = vdwg.mxu0
  %v649 = vld [vmem:[%s4] sm:$0xff]
  %v650 = vld [vmem:[%s4 + $0x8] sm:$0xff]
  %v651 = vld [vmem:[%s4 + $0x10] sm:$0xff]
  %v652 = vld [vmem:[%s4 + $0x18] sm:$0xff]
  %v653 = vld [vmem:[%s4 + $0x20] sm:$0xff]
  %v654 = vld [vmem:[%s4 + $0x28] sm:$0xff]
  %v655 = vld [vmem:[%s4 + $0x30] sm:$0xff]
  %v656 = vld [vmem:[%s4 + $0x38] sm:$0xff]
  %v657 = vld [vmem:[%s4 + $0x40] sm:$0xff]
  %v658 = vld [vmem:[%s4 + $0x48] sm:$0xff]
  %v659 = vld [vmem:[%s4 + $0x50] sm:$0xff]
  %v660 = vld [vmem:[%s4 + $0x58] sm:$0xff]
  %v661 = vld [vmem:[%s4 + $0x60] sm:$0xff]
  %v662 = vld [vmem:[%s4 + $0x68] sm:$0xff]
  %v663 = vld [vmem:[%s4 + $0x70] sm:$0xff]
  %v664 = vld [vmem:[%s4 + $0x78] sm:$0xff]
  %665 = vmatprep.subr.mxu0 0.0
  %666 = vmatpush1.msra.mxu0 %v664
  %667 = vmatprep.subr.mxu0 0.0
  %668 = vmatpush1.msra.mxu0 %v663
  %669 = vmatprep.subr.mxu0 0.0
  %670 = vmatpush1.msra.mxu0 %v662
  %671 = vmatprep.subr.mxu0 0.0
  %672 = vmatpush1.msra.mxu0 %v661
  %673 = vmatprep.subr.mxu0 0.0
  %674 = vmatpush1.msra.mxu0 %v660
  %675 = vmatprep.subr.mxu0 0.0
  %676 = vmatpush1.msra.mxu0 %v659
  %677 = vmatprep.subr.mxu0 0.0
  %678 = vmatpush1.msra.mxu0 %v658
  %679 = vmatprep.subr.mxu0 0.0
  %680 = vmatpush1.msra.mxu0 %v657
  %681 = vmatprep.subr.mxu0 0.0
  %682 = vmatpush1.msra.mxu0 %v656
  %683 = vmatprep.subr.mxu0 0.0
  %684 = vmatpush1.msra.mxu0 %v655
  %685 = vmatprep.subr.mxu0 0.0
  %686 = vmatpush1.msra.mxu0 %v654
  %687 = vmatprep.subr.mxu0 0.0
  %688 = vmatpush1.msra.mxu0 %v653
  %689 = vmatprep.subr.mxu0 0.0
  %690 = vmatpush1.msra.mxu0 %v652
  %691 = vmatprep.subr.mxu0 0.0
  %692 = vmatpush1.msra.mxu0 %v651
  %693 = vmatprep.subr.mxu0 0.0
  %694 = vmatpush1.msra.mxu0 %v650
  %695 = vmatprep.subr.mxu0 0.0
  %696 = vmatpush1.msra.mxu0 %v649
  %697 = vmatprep.subr.mxu0 0.0
  %698 = vmatpush2.msra.mxu0 0.0
  %699 = vmatprep.subr.mxu0 0.0
  %700 = vmatpush2.msra.mxu0 0.0
  %701 = vmatprep.subr.mxu0 0.0
  %702 = vmatpush2.msra.mxu0 0.0
  %703 = vmatprep.subr.mxu0 0.0
  %704 = vmatpush2.msra.mxu0 0.0
  %705 = vmatprep.subr.mxu0 0.0
  %706 = vmatpush2.msra.mxu0 0.0
  %707 = vmatprep.subr.mxu0 0.0
  %708 = vmatpush2.msra.mxu0 0.0
  %709 = vmatprep.subr.mxu0 0.0
  %710 = vmatpush2.msra.mxu0 0.0
  %711 = vmatprep.subr.mxu0 0.0
  %712 = vmatpush2.msra.mxu0 0.0
  %713 = vmatprep.subr.mxu0 0.0
  %714 = vmatpush2.msra.mxu0 0.0
  %715 = vmatprep.subr.mxu0 0.0
  %716 = vmatpush2.msra.mxu0 0.0
  %717 = vmatprep.subr.mxu0 0.0
  %718 = vmatpush2.msra.mxu0 0.0
  %719 = vmatprep.subr.mxu0 0.0
  %720 = vmatpush2.msra.mxu0 0.0
  %721 = vmatprep.subr.mxu0 0.0
  %722 = vmatpush2.msra.mxu0 0.0
  %723 = vmatprep.subr.mxu0 0.0
  %724 = vmatpush2.msra.mxu0 0.0
  %725 = vmatprep.subr.mxu0 0.0
  %726 = vmatpush2.msra.mxu0 0.0
  %727 = vmatprep.subr.mxu0 0.0
  %728 = vmatpush2.msra.mxu0 0.0
  %729 = vmatprep.mubr.f32.mxu0 0.0
  %730 = vmatmul.mubr.f32.gmra.mxu0 %v641
  %v731 = vpop.f32.mrf.mxu0
  %v732 = vadd.f32 0.0, %v731
  %v733 = vpop.f32.mrf.mxu0
  %734 = vmatprep.mubr.f32.mxu0 0.0
  %735 = vmatmul.mubr.f32.gmra.mxu0 %v646
  %v736 = vpop.f32.mrf.mxu0
  %v737 = vadd.f32 0.0, %v736
  %v738 = vpop.f32.mrf.mxu0
  %739 = vdwg.mxu0
  %v740 = vadd.f32 %v572, %v732
  %v741 = vadd.f32 %v572, %v737
  %742 = vmatprep.subr.mxu0 0.0
  %743 = vmatpush1.msra.mxu0 0.0
  %744 = vmatprep.subr.mxu0 0.0
  %745 = vmatpush1.msra.mxu0 0.0
  %746 = vmatprep.subr.mxu0 0.0
  %747 = vmatpush1.msra.mxu0 0.0
  %748 = vmatprep.subr.mxu0 0.0
  %749 = vmatpush1.msra.mxu0 0.0
  %750 = vmatprep.subr.mxu0 0.0
  %751 = vmatpush1.msra.mxu0 0.0
  %752 = vmatprep.subr.mxu0 0.0
  %753 = vmatpush1.msra.mxu0 0.0
  %754 = vmatprep.subr.mxu0 0.0
  %755 = vmatpush1.msra.mxu0 0.0
  %756 = vmatprep.subr.mxu0 0.0
  %757 = vmatpush1.msra.mxu0 0.0
  %758 = vmatprep.subr.mxu0 0.0
  %759 = vmatpush1.msra.mxu0 0.0
  %760 = vmatprep.subr.mxu0 0.0
  %761 = vmatpush1.msra.mxu0 0.0
  %762 = vmatprep.subr.mxu0 0.0
  %763 = vmatpush1.msra.mxu0 0.0
  %764 = vmatprep.subr.mxu0 0.0
  %765 = vmatpush1.msra.mxu0 0.0
  %766 = vmatprep.subr.mxu0 0.0
  %767 = vmatpush1.msra.mxu0 0.0
  %768 = vmatprep.subr.mxu0 0.0
  %769 = vmatpush1.msra.mxu0 0.0
  %770 = vmatprep.subr.mxu0 0.0
  %771 = vmatpush1.msra.mxu0 %v566
  %772 = vmatprep.subr.mxu0 0.0
  %773 = vmatpush1.msra.mxu0 %v565
  %774 = vmatprep.subr.mxu0 0.0
  %775 = vmatpush2.msra.mxu0 0.0
  %776 = vmatprep.subr.mxu0 0.0
  %777 = vmatpush2.msra.mxu0 0.0
  %778 = vmatprep.subr.mxu0 0.0
  %779 = vmatpush2.msra.mxu0 0.0
  %780 = vmatprep.subr.mxu0 0.0
  %781 = vmatpush2.msra.mxu0 0.0
  %782 = vmatprep.subr.mxu0 0.0
  %783 = vmatpush2.msra.mxu0 0.0
  %784 = vmatprep.subr.mxu0 0.0
  %785 = vmatpush2.msra.mxu0 0.0
  %786 = vmatprep.subr.mxu0 0.0
  %787 = vmatpush2.msra.mxu0 0.0
  %788 = vmatprep.subr.mxu0 0.0
  %789 = vmatpush2.msra.mxu0 0.0
  %790 = vmatprep.subr.mxu0 0.0
  %791 = vmatpush2.msra.mxu0 0.0
  %792 = vmatprep.subr.mxu0 0.0
  %793 = vmatpush2.msra.mxu0 0.0
  %794 = vmatprep.subr.mxu0 0.0
  %795 = vmatpush2.msra.mxu0 0.0
  %796 = vmatprep.subr.mxu0 0.0
  %797 = vmatpush2.msra.mxu0 0.0
  %798 = vmatprep.subr.mxu0 0.0
  %799 = vmatpush2.msra.mxu0 0.0
  %800 = vmatprep.subr.mxu0 0.0
  %801 = vmatpush2.msra.mxu0 0.0
  %802 = vmatprep.subr.mxu0 0.0
  %803 = vmatpush2.msra.mxu0 0.0
  %804 = vmatprep.subr.mxu0 0.0
  %805 = vmatpush2.msra.mxu0 0.0
  %806 = vmatprep.mubr.f32.mxu0 0.0
  %807 = vmatmul.mubr.f32.gmra.mxu0 %v213
  %v808 = vpop.f32.mrf.mxu0
  %v809 = vadd.f32 0.0, %v808
  %v810 = vpop.f32.mrf.mxu0
  %811 = vmatprep.mubr.f32.mxu0 0.0
  %812 = vmatmul.mubr.f32.gmra.mxu0 %v216
  %v813 = vpop.f32.mrf.mxu0
  %v814 = vadd.f32 0.0, %v813
  %v815 = vpop.f32.mrf.mxu0
  %816 = vdwg.mxu0
  %s817 = scalar_lea.vmem %s4, 128
  %v818 = vld [vmem:[%s817] sm:$0xff]
  %v819 = vld [vmem:[%s817 + $0x8] sm:$0xff]
  %v820 = vld [vmem:[%s817 + $0x10] sm:$0xff]
  %v821 = vld [vmem:[%s817 + $0x18] sm:$0xff]
  %v822 = vld [vmem:[%s817 + $0x20] sm:$0xff]
  %v823 = vld [vmem:[%s817 + $0x28] sm:$0xff]
  %v824 = vld [vmem:[%s817 + $0x30] sm:$0xff]
  %v825 = vld [vmem:[%s817 + $0x38] sm:$0xff]
  %v826 = vld [vmem:[%s817 + $0x40] sm:$0xff]
  %v827 = vld [vmem:[%s817 + $0x48] sm:$0xff]
  %v828 = vld [vmem:[%s817 + $0x50] sm:$0xff]
  %v829 = vld [vmem:[%s817 + $0x58] sm:$0xff]
  %v830 = vld [vmem:[%s817 + $0x60] sm:$0xff]
  %v831 = vld [vmem:[%s817 + $0x68] sm:$0xff]
  %v832 = vld [vmem:[%s817 + $0x70] sm:$0xff]
  %v833 = vld [vmem:[%s817 + $0x78] sm:$0xff]
  %834 = vmatprep.subr.mxu0 0.0
  %835 = vmatpush1.msra.mxu0 %v833
  %836 = vmatprep.subr.mxu0 0.0
  %837 = vmatpush1.msra.mxu0 %v832
  %838 = vmatprep.subr.mxu0 0.0
  %839 = vmatpush1.msra.mxu0 %v831
  %840 = vmatprep.subr.mxu0 0.0
  %841 = vmatpush1.msra.mxu0 %v830
  %842 = vmatprep.subr.mxu0 0.0
  %843 = vmatpush1.msra.mxu0 %v829
  %844 = vmatprep.subr.mxu0 0.0
  %845 = vmatpush1.msra.mxu0 %v828
  %846 = vmatprep.subr.mxu0 0.0
  %847 = vmatpush1.msra.mxu0 %v827
  %848 = vmatprep.subr.mxu0 0.0
  %849 = vmatpush1.msra.mxu0 %v826
  %850 = vmatprep.subr.mxu0 0.0
  %851 = vmatpush1.msra.mxu0 %v825
  %852 = vmatprep.subr.mxu0 0.0
  %853 = vmatpush1.msra.mxu0 %v824
  %854 = vmatprep.subr.mxu0 0.0
  %855 = vmatpush1.msra.mxu0 %v823
  %856 = vmatprep.subr.mxu0 0.0
  %857 = vmatpush1.msra.mxu0 %v822
  %858 = vmatprep.subr.mxu0 0.0
  %859 = vmatpush1.msra.mxu0 %v821
  %860 = vmatprep.subr.mxu0 0.0
  %861 = vmatpush1.msra.mxu0 %v820
  %862 = vmatprep.subr.mxu0 0.0
  %863 = vmatpush1.msra.mxu0 %v819
  %864 = vmatprep.subr.mxu0 0.0
  %865 = vmatpush1.msra.mxu0 %v818
  %866 = vmatprep.subr.mxu0 0.0
  %867 = vmatpush2.msra.mxu0 0.0
  %868 = vmatprep.subr.mxu0 0.0
  %869 = vmatpush2.msra.mxu0 0.0
  %870 = vmatprep.subr.mxu0 0.0
  %871 = vmatpush2.msra.mxu0 0.0
  %872 = vmatprep.subr.mxu0 0.0
  %873 = vmatpush2.msra.mxu0 0.0
  %874 = vmatprep.subr.mxu0 0.0
  %875 = vmatpush2.msra.mxu0 0.0
  %876 = vmatprep.subr.mxu0 0.0
  %877 = vmatpush2.msra.mxu0 0.0
  %878 = vmatprep.subr.mxu0 0.0
  %879 = vmatpush2.msra.mxu0 0.0
  %880 = vmatprep.subr.mxu0 0.0
  %881 = vmatpush2.msra.mxu0 0.0
  %882 = vmatprep.subr.mxu0 0.0
  %883 = vmatpush2.msra.mxu0 0.0
  %884 = vmatprep.subr.mxu0 0.0
  %885 = vmatpush2.msra.mxu0 0.0
  %886 = vmatprep.subr.mxu0 0.0
  %887 = vmatpush2.msra.mxu0 0.0
  %888 = vmatprep.subr.mxu0 0.0
  %889 = vmatpush2.msra.mxu0 0.0
  %890 = vmatprep.subr.mxu0 0.0
  %891 = vmatpush2.msra.mxu0 0.0
  %892 = vmatprep.subr.mxu0 0.0
  %893 = vmatpush2.msra.mxu0 0.0
  %894 = vmatprep.subr.mxu0 0.0
  %895 = vmatpush2.msra.mxu0 0.0
  %896 = vmatprep.subr.mxu0 0.0
  %897 = vmatpush2.msra.mxu0 0.0
  %898 = vmatprep.mubr.f32.mxu0 0.0
  %899 = vmatmul.mubr.f32.gmra.mxu0 %v809
  %v900 = vpop.f32.mrf.mxu0
  %v901 = vadd.f32 0.0, %v900
  %v902 = vpop.f32.mrf.mxu0
  %903 = vmatprep.mubr.f32.mxu0 0.0
  %904 = vmatmul.mubr.f32.gmra.mxu0 %v814
  %v905 = vpop.f32.mrf.mxu0
  %v906 = vadd.f32 0.0, %v905
  %v907 = vpop.f32.mrf.mxu0
  %908 = vdwg.mxu0
  %v909 = vadd.f32 %v740, %v901
  %v910 = vadd.f32 %v741, %v906
  %911 = vmatprep.subr.mxu0 0.0
  %912 = vmatpush1.msra.mxu0 0.0
  %913 = vmatprep.subr.mxu0 0.0
  %914 = vmatpush1.msra.mxu0 0.0
  %915 = vmatprep.subr.mxu0 0.0
  %916 = vmatpush1.msra.mxu0 0.0
  %917 = vmatprep.subr.mxu0 0.0
  %918 = vmatpush1.msra.mxu0 0.0
  %919 = vmatprep.subr.mxu0 0.0
  %920 = vmatpush1.msra.mxu0 0.0
  %921 = vmatprep.subr.mxu0 0.0
  %922 = vmatpush1.msra.mxu0 0.0
  %923 = vmatprep.subr.mxu0 0.0
  %924 = vmatpush1.msra.mxu0 0.0
  %925 = vmatprep.subr.mxu0 0.0
  %926 = vmatpush1.msra.mxu0 0.0
  %927 = vmatprep.subr.mxu0 0.0
  %928 = vmatpush1.msra.mxu0 0.0
  %929 = vmatprep.subr.mxu0 0.0
  %930 = vmatpush1.msra.mxu0 0.0
  %931 = vmatprep.subr.mxu0 0.0
  %932 = vmatpush1.msra.mxu0 0.0
  %933 = vmatprep.subr.mxu0 0.0
  %934 = vmatpush1.msra.mxu0 0.0
  %935 = vmatprep.subr.mxu0 0.0
  %936 = vmatpush1.msra.mxu0 0.0
  %937 = vmatprep.subr.mxu0 0.0
  %938 = vmatpush1.msra.mxu0 0.0
  %939 = vmatprep.subr.mxu0 0.0
  %940 = vmatpush1.msra.mxu0 %v566
  %941 = vmatprep.subr.mxu0 0.0
  %942 = vmatpush1.msra.mxu0 %v565
  %943 = vmatprep.subr.mxu0 0.0
  %944 = vmatpush2.msra.mxu0 0.0
  %945 = vmatprep.subr.mxu0 0.0
  %946 = vmatpush2.msra.mxu0 0.0
  %947 = vmatprep.subr.mxu0 0.0
  %948 = vmatpush2.msra.mxu0 0.0
  %949 = vmatprep.subr.mxu0 0.0
  %950 = vmatpush2.msra.mxu0 0.0
  %951 = vmatprep.subr.mxu0 0.0
  %952 = vmatpush2.msra.mxu0 0.0
  %953 = vmatprep.subr.mxu0 0.0
  %954 = vmatpush2.msra.mxu0 0.0
  %955 = vmatprep.subr.mxu0 0.0
  %956 = vmatpush2.msra.mxu0 0.0
  %957 = vmatprep.subr.mxu0 0.0
  %958 = vmatpush2.msra.mxu0 0.0
  %959 = vmatprep.subr.mxu0 0.0
  %960 = vmatpush2.msra.mxu0 0.0
  %961 = vmatprep.subr.mxu0 0.0
  %962 = vmatpush2.msra.mxu0 0.0
  %963 = vmatprep.subr.mxu0 0.0
  %964 = vmatpush2.msra.mxu0 0.0
  %965 = vmatprep.subr.mxu0 0.0
  %966 = vmatpush2.msra.mxu0 0.0
  %967 = vmatprep.subr.mxu0 0.0
  %968 = vmatpush2.msra.mxu0 0.0
  %969 = vmatprep.subr.mxu0 0.0
  %970 = vmatpush2.msra.mxu0 0.0
  %971 = vmatprep.subr.mxu0 0.0
  %972 = vmatpush2.msra.mxu0 0.0
  %973 = vmatprep.subr.mxu0 0.0
  %974 = vmatpush2.msra.mxu0 0.0
  %975 = vmatprep.mubr.f32.mxu0 0.0
  %976 = vmatmul.mubr.f32.gmra.mxu0 %v391
  %v977 = vpop.f32.mrf.mxu0
  %v978 = vadd.f32 0.0, %v977
  %v979 = vpop.f32.mrf.mxu0
  %980 = vmatprep.mubr.f32.mxu0 0.0
  %981 = vmatmul.mubr.f32.gmra.mxu0 %v394
  %v982 = vpop.f32.mrf.mxu0
  %v983 = vadd.f32 0.0, %v982
  %v984 = vpop.f32.mrf.mxu0
  %985 = vdwg.mxu0
  %s986 = scalar_lea.vmem %s4, 256
  %v987 = vld [vmem:[%s986] sm:$0xff]
  %v988 = vld [vmem:[%s986 + $0x8] sm:$0xff]
  %v989 = vld [vmem:[%s986 + $0x10] sm:$0xff]
  %v990 = vld [vmem:[%s986 + $0x18] sm:$0xff]
  %v991 = vld [vmem:[%s986 + $0x20] sm:$0xff]
  %v992 = vld [vmem:[%s986 + $0x28] sm:$0xff]
  %v993 = vld [vmem:[%s986 + $0x30] sm:$0xff]
  %v994 = vld [vmem:[%s986 + $0x38] sm:$0xff]
  %v995 = vld [vmem:[%s986 + $0x40] sm:$0xff]
  %v996 = vld [vmem:[%s986 + $0x48] sm:$0xff]
  %v997 = vld [vmem:[%s986 + $0x50] sm:$0xff]
  %v998 = vld [vmem:[%s986 + $0x58] sm:$0xff]
  %v999 = vld [vmem:[%s986 + $0x60] sm:$0xff]
  %v1000 = vld [vmem:[%s986 + $0x68] sm:$0xff]
  %v1001 = vld [vmem:[%s986 + $0x70] sm:$0xff]
  %v1002 = vld [vmem:[%s986 + $0x78] sm:$0xff]
  %1003 = vmatprep.subr.mxu0 0.0
  %1004 = vmatpush1.msra.mxu0 %v1002
  %1005 = vmatprep.subr.mxu0 0.0
  %1006 = vmatpush1.msra.mxu0 %v1001
  %1007 = vmatprep.subr.mxu0 0.0
  %1008 = vmatpush1.msra.mxu0 %v1000
  %1009 = vmatprep.subr.mxu0 0.0
  %1010 = vmatpush1.msra.mxu0 %v999
  %1011 = vmatprep.subr.mxu0 0.0
  %1012 = vmatpush1.msra.mxu0 %v998
  %1013 = vmatprep.subr.mxu0 0.0
  %1014 = vmatpush1.msra.mxu0 %v997
  %1015 = vmatprep.subr.mxu0 0.0
  %1016 = vmatpush1.msra.mxu0 %v996
  %1017 = vmatprep.subr.mxu0 0.0
  %1018 = vmatpush1.msra.mxu0 %v995
  %1019 = vmatprep.subr.mxu0 0.0
  %1020 = vmatpush1.msra.mxu0 %v994
  %1021 = vmatprep.subr.mxu0 0.0
  %1022 = vmatpush1.msra.mxu0 %v993
  %1023 = vmatprep.subr.mxu0 0.0
  %1024 = vmatpush1.msra.mxu0 %v992
  %1025 = vmatprep.subr.mxu0 0.0
  %1026 = vmatpush1.msra.mxu0 %v991
  %1027 = vmatprep.subr.mxu0 0.0
  %1028 = vmatpush1.msra.mxu0 %v990
  %1029 = vmatprep.subr.mxu0 0.0
  %1030 = vmatpush1.msra.mxu0 %v989
  %1031 = vmatprep.subr.mxu0 0.0
  %1032 = vmatpush1.msra.mxu0 %v988
  %1033 = vmatprep.subr.mxu0 0.0
  %1034 = vmatpush1.msra.mxu0 %v987
  %1035 = vmatprep.subr.mxu0 0.0
  %1036 = vmatpush2.msra.mxu0 0.0
  %1037 = vmatprep.subr.mxu0 0.0
  %1038 = vmatpush2.msra.mxu0 0.0
  %1039 = vmatprep.subr.mxu0 0.0
  %1040 = vmatpush2.msra.mxu0 0.0
  %1041 = vmatprep.subr.mxu0 0.0
  %1042 = vmatpush2.msra.mxu0 0.0
  %1043 = vmatprep.subr.mxu0 0.0
  %1044 = vmatpush2.msra.mxu0 0.0
  %1045 = vmatprep.subr.mxu0 0.0
  %1046 = vmatpush2.msra.mxu0 0.0
  %1047 = vmatprep.subr.mxu0 0.0
  %1048 = vmatpush2.msra.mxu0 0.0
  %1049 = vmatprep.subr.mxu0 0.0
  %1050 = vmatpush2.msra.mxu0 0.0
  %1051 = vmatprep.subr.mxu0 0.0
  %1052 = vmatpush2.msra.mxu0 0.0
  %1053 = vmatprep.subr.mxu0 0.0
  %1054 = vmatpush2.msra.mxu0 0.0
  %1055 = vmatprep.subr.mxu0 0.0
  %1056 = vmatpush2.msra.mxu0 0.0
  %1057 = vmatprep.subr.mxu0 0.0
  %1058 = vmatpush2.msra.mxu0 0.0
  %1059 = vmatprep.subr.mxu0 0.0
  %1060 = vmatpush2.msra.mxu0 0.0
  %1061 = vmatprep.subr.mxu0 0.0
  %1062 = vmatpush2.msra.mxu0 0.0
  %1063 = vmatprep.subr.mxu0 0.0
  %1064 = vmatpush2.msra.mxu0 0.0
  %1065 = vmatprep.subr.mxu0 0.0
  %1066 = vmatpush2.msra.mxu0 0.0
  %1067 = vmatprep.mubr.f32.mxu0 0.0
  %1068 = vmatmul.mubr.f32.gmra.mxu0 %v978
  %v1069 = vpop.f32.mrf.mxu0
  %v1070 = vadd.f32 0.0, %v1069
  %v1071 = vpop.f32.mrf.mxu0
  %1072 = vmatprep.mubr.f32.mxu0 0.0
  %1073 = vmatmul.mubr.f32.gmra.mxu0 %v983
  %v1074 = vpop.f32.mrf.mxu0
  %v1075 = vadd.f32 0.0, %v1074
  %v1076 = vpop.f32.mrf.mxu0
  %1077 = vdwg.mxu0
  %v1078 = vadd.f32 %v909, %v1070
  %v1079 = vadd.f32 %v910, %v1075
  %v1080 = vadd.f32 %v23, %v1078
  %v1081 = vadd.f32 %v24, %v1079
  %1082 = vst [vmem:[%s6] sm:$0xff] %v1080
  %1083 = vst [vmem:[%s6 + $0x8] sm:$0xff] %v1081
  // Predicated region
  $region26: #{resblock_forward.1} parent=0 // pred_check
    _
  $region27: #{resblock_forward.1} parent=0 // pred_check_branch
    %1085 = sbr.rel (0) target = $region29
  $region28: #{resblock_forward.1} parent=0 // pred_region
    _
  $region29: #{resblock_forward.1} parent=0 // pred_fallthru
    _
  // Predicated region
  $region30: #{resblock_forward.1} parent=0 // pred_check
    _
  $region31: #{resblock_forward.1} parent=0 // pred_check_branch
    %1087 = sbr.rel (0) target = $region33
  $region32: #{resblock_forward.1} parent=0 // pred_region
    _
  $region33: #{resblock_forward.1} parent=0 // pred_fallthru
    _

</llo_original>
